<compile_context>
chip_gen: v5e
topology: v5e:2x2
jax: 0.10.0
libtpu: 0.0.40
codegen_flags: <defaults>
</compile_context>

<pallas_src>
import functools

import jax
import jax.numpy as jnp
import numpy as np
from jax.experimental import pallas as pl
from jax.experimental.pallas import tpu as pltpu

LANE = 128
TB_ALIGN = 256       # batch-lane tile alignment: full MXU N passes on all generations
STATE_ALIGN = 32     # bf16 sublane packing is (16,128); 24 -> 32 keeps the K tiles clean


def _round_up(n, m):
    return ((n + m - 1) // m) * m


def actor_kernel(x_ref, w1_ref, b1_ref, w2_ref, b2_ref,
                 w3_ref, b3_ref, w4_ref, b4_ref, o_ref):
    """One batch tile of the fused 4-layer MLP, feature-major.

    x_ref:   (S_pad, TB)  bf16   (batch on the lane axis)
    w*_ref:  (out, in)    bf16   (PyTorch orientation, VMEM-resident)
    b*_ref:  (out, 1)     f32    (lane-broadcast against the batch)
    o_ref:   (A, TB)      f32
    bf16 MXU inputs, f32 accumulation (preferred_element_type), f32 elementwise.
    """
    x = x_ref[...]
    h = jnp.dot(w1_ref[...], x, preferred_element_type=jnp.float32)
    h = jnp.maximum(h + b1_ref[...], 0.0)

    h = jnp.dot(w2_ref[...], h.astype(jnp.bfloat16),
                preferred_element_type=jnp.float32)
    h = jnp.maximum(h + b2_ref[...], 0.0)

    h = jnp.dot(w3_ref[...], h.astype(jnp.bfloat16),
                preferred_element_type=jnp.float32)
    h = jnp.maximum(h + b3_ref[...], 0.0)

    h = jnp.dot(w4_ref[...], h.astype(jnp.bfloat16),
                preferred_element_type=jnp.float32)
    o_ref[...] = jnp.tanh(h + b4_ref[...])


@functools.partial(jax.jit, static_argnames=("block_b",))
def actor_forward(x, kernel_params, *, block_b=2048):
    """Actor forward: x [B, state_size] -> [B, action_size].

    `kernel_params` come from `prepare_actor_params` (bf16 [out,in] weights,
    f32 [out,1] biases).  block_b ~ 2048 keeps double-buffered tiles + resident
    weights + the ~2 MiB f32 hidden activations far under v7x's 32 MiB default
    scoped VMEM while amortizing the ~0.35 us per-grid-step overhead.
    """
    (w1, b1), (w2, b2), (w3, b3), (w4, b4) = kernel_params
    B, S = x.shape
    S_pad = w1.shape[1]
    A = w4.shape[0]

    # Batch tile: multiple of 256 lanes, capped by block_b.
    TB = min(_round_up(block_b, TB_ALIGN), _round_up(max(B, 1), TB_ALIGN))
    num_tiles = -(-B // TB)
    if num_tiles == 1 and B > TB_ALIGN:
        # Guarantee >=2 tiles for moderate/large batches so ("parallel",) actually
        # splits work across v7x's two TensorCores.
        TB = _round_up(-(-B // 2), TB_ALIGN)
        num_tiles = -(-B // TB)
    B_pad = num_tiles * TB

    # Feature-major input slab [S_pad, B_pad] bf16.  Padded batch columns and
    # padded state rows are zero; zeros stay exactly zero through matmul+bias+
    # relu of the pad lanes we slice off, so the real outputs are unaffected.
    xT = jnp.pad(x.astype(jnp.bfloat16), ((0, B_pad - B), (0, S_pad - S))).T

    grid = (num_tiles,)

    def lane_spec(rows):
        # Tiled along the batch-lane axis only.
        return pl.BlockSpec((rows, TB), lambda i: (0, i))

    def resident_spec(arr):
        # Constant block index => fetched once, stays VMEM-resident over the grid.
        return pl.BlockSpec(arr.shape, lambda i: (0, 0))

    h1, h2, h3 = w1.shape[0], w2.shape[0], w3.shape[0]
    flops = 2 * B_pad * (S_pad * h1 + h1 * h2 + h2 * h3 + h3 * A)
    bytes_accessed = (
        xT.size * 2
        + (w1.size + w2.size + w3.size + w4.size) * 2
        + (b1.size + b2.size + b3.size + b4.size) * 4
        + B_pad * A * 4
    )

    out_p = pl.pallas_call(
        actor_kernel,
        out_shape=jax.ShapeDtypeStruct((A, B_pad), jnp.float32),
        grid=grid,
        in_specs=[
            lane_spec(S_pad),
            resident_spec(w1), resident_spec(b1),
            resident_spec(w2), resident_spec(b2),
            resident_spec(w3), resident_spec(b3),
            resident_spec(w4), resident_spec(b4),
        ],
        out_specs=lane_spec(A),
        compiler_params=pltpu.CompilerParams(
            dimension_semantics=("parallel",)),   # batch tiles over TCs (v7x megacore)
        cost_estimate=pl.CostEstimate(
            flops=flops, transcendentals=B_pad * A, bytes_accessed=bytes_accessed),
    )(xT, w1, b1, w2, b2, w3, b3, w4, b4)

    # [A, B_pad] -> [B, A]; padded batch columns are discarded.
    return out_p[:, :B].T


def init_actor_params(key, state_size, action_size, layer_sizes=(200, 200, 200)):
    """Deterministic init mirroring the PyTorch module's initialize_weights().

    hidden_init uses layer.weight.size()[0] == out_features, so
    lim = 1/sqrt(out_features) for fc1..fc3; fc4 weights are U(-3e-3, 3e-3).
    Biases keep nn.Linear's default init: U(-1/sqrt(in_features), 1/sqrt(in_features)).
    Weights stored in PyTorch [out, in] orientation, f32 logical shapes.
    """
    dims = [state_size, *layer_sizes, action_size]
    params = []
    keys = jax.random.split(key, 8)
    for i in range(4):
        fan_in, fan_out = dims[i], dims[i + 1]
        w_lim = (1.0 / np.sqrt(fan_out)) if i < 3 else 3e-3
        b_lim = 1.0 / np.sqrt(fan_in)
        w = jax.random.uniform(keys[2 * i], (fan_out, fan_in),
                               minval=-w_lim, maxval=w_lim, dtype=jnp.float32)
        b = jax.random.uniform(keys[2 * i + 1], (fan_out,),
                               minval=-b_lim, maxval=b_lim, dtype=jnp.float32)
        params.append((w, b))
    return params


def prepare_actor_params(params):
    """Convert logical f32 params to the kernel layout.

    Weights: bf16, PyTorch [out, in] order; fc1's state dim zero-padded to a
    multiple of 32 (clean bf16 (16,128) K tiles) — exact through matmul.
    Biases: f32 columns [out, 1] (lane-broadcast in the kernel).
    Note: bf16 weights introduce ~0.4% relative error vs the f32 PyTorch Actor.
    """
    prepared = []
    for i, (w, b) in enumerate(params):
        fo, fi = w.shape
        if i == 0:
            fi_p = _round_up(fi, STATE_ALIGN)
            w = jnp.pad(w, ((0, 0), (0, fi_p - fi)))
        prepared.append((w.astype(jnp.bfloat16),
                         b.reshape(fo, 1).astype(jnp.float32)))
    return tuple(prepared)


def actor_reference(x, params):
    """Pure f32 math reference (what the PyTorch module computes)."""
    h = x.astype(jnp.float32)
    for i, (w, b) in enumerate(params):
        h = h @ w.T + b
        h = jnp.maximum(h, 0.0) if i < 3 else jnp.tanh(h)
    return h


if __name__ == "__main__":
    key = jax.random.PRNGKey(0)
    k_param, k_x, k_x2 = jax.random.split(key, 3)

    # Tennis env: state_size=24, action_size=2.
    B, state_size, action_size = 2, 24, 2
    params = init_actor_params(k_param, state_size, action_size)
    kernel_params = prepare_actor_params(params)

    # Small batch (single 256-lane tile).
    x = jax.random.normal(k_x, (B, state_size), dtype=jnp.float32)
    out = jax.block_until_ready(actor_forward(x, kernel_params))
    ref = actor_reference(x, params)
    np.testing.assert_allclose(np.asarray(out), np.asarray(ref),
                               rtol=1e-2, atol=1e-2)
    assert out.shape == (B, action_size)

    # Larger batch: default block_b splits it into 2 x 256-lane tiles (grid=2),
    # exercising pipelined tiles, resident weights and the v7x two-TC split path.
    B2 = 300
    x2 = jax.random.normal(k_x2, (B2, state_size), dtype=jnp.float32)
    out2 = jax.block_until_ready(actor_forward(x2, kernel_params))
    ref2 = actor_reference(x2, params)
    np.testing.assert_allclose(np.asarray(out2), np.asarray(ref2),
                               rtol=1e-2, atol=1e-2)
    assert out2.shape == (B2, action_size)

    print("KERNEL_OK")
</pallas_src>

<mosaic_0001>
module attributes {stable_mosaic.version = 11 : i64} {
  func.func @actor_kernel(%arg0: i32, %arg1: memref<32x256xbf16, #tpu.memory_space<vmem>>, %arg2: memref<200x32xbf16, #tpu.memory_space<vmem>>, %arg3: memref<200x1xf32, #tpu.memory_space<vmem>>, %arg4: memref<200x200xbf16, #tpu.memory_space<vmem>>, %arg5: memref<200x1xf32, #tpu.memory_space<vmem>>, %arg6: memref<200x200xbf16, #tpu.memory_space<vmem>>, %arg7: memref<200x1xf32, #tpu.memory_space<vmem>>, %arg8: memref<2x200xbf16, #tpu.memory_space<vmem>>, %arg9: memref<2x1xf32, #tpu.memory_space<vmem>>, %arg10: memref<2x256xf32, #tpu.memory_space<vmem>>) attributes {dimension_semantics = [#tpu.dimension_semantics<parallel>], iteration_bounds = array<i64: 1>, scalar_prefetch = 0 : i64, scratch_operands = 0 : i64, tpu.core_type = #tpu.core_type<tc>, window_params = [{transform_indices = @transform_0, window_bounds = array<i64: 32, 256>}, {pipeline_mode = #tpu.pipeline_mode<synchronous>, transform_indices = @transform_1, window_bounds = array<i64: 200, 32>}, {pipeline_mode = #tpu.pipeline_mode<synchronous>, transform_indices = @transform_2, window_bounds = array<i64: 200, 1>}, {pipeline_mode = #tpu.pipeline_mode<synchronous>, transform_indices = @transform_3, window_bounds = array<i64: 200, 200>}, {pipeline_mode = #tpu.pipeline_mode<synchronous>, transform_indices = @transform_4, window_bounds = array<i64: 200, 1>}, {pipeline_mode = #tpu.pipeline_mode<synchronous>, transform_indices = @transform_5, window_bounds = array<i64: 200, 200>}, {pipeline_mode = #tpu.pipeline_mode<synchronous>, transform_indices = @transform_6, window_bounds = array<i64: 200, 1>}, {pipeline_mode = #tpu.pipeline_mode<synchronous>, transform_indices = @transform_7, window_bounds = array<i64: 2, 200>}, {pipeline_mode = #tpu.pipeline_mode<synchronous>, transform_indices = @transform_8, window_bounds = array<i64: 2, 1>}, {transform_indices = @transform_9, window_bounds = array<i64: 2, 256>}]} {
    %c0 = arith.constant 0 : index
    %c0_0 = arith.constant 0 : index
    %0 = vector.load %arg1[%c0, %c0_0] : memref<32x256xbf16, #tpu.memory_space<vmem>>, vector<32x256xbf16>
    %c0_1 = arith.constant 0 : index
    %c0_2 = arith.constant 0 : index
    %1 = vector.load %arg2[%c0_1, %c0_2] : memref<200x32xbf16, #tpu.memory_space<vmem>>, vector<200x32xbf16>
    %cst = arith.constant dense<0.000000e+00> : vector<200x256xf32>
    %2 = tpu.matmul %1, %0, %cst {dimension_numbers = #tpu.dot_dimension_numbers<[1], [0], [0], [1], [0, 0, 1, 1], [], []>} : vector<200x32xbf16>, vector<32x256xbf16>, vector<200x256xf32> -> vector<200x256xf32>
    %c0_3 = arith.constant 0 : index
    %c0_4 = arith.constant 0 : index
    %3 = vector.load %arg3[%c0_3, %c0_4] : memref<200x1xf32, #tpu.memory_space<vmem>>, vector<200x1xf32>
    %4 = vector.broadcast %3 : vector<200x1xf32> to vector<200x256xf32>
    %5 = arith.addf %2, %4 : vector<200x256xf32>
    %cst_5 = arith.constant 0.000000e+00 : f32
    %6 = vector.broadcast %cst_5 : f32 to vector<200x256xf32>
    %7 = arith.maximumf %5, %6 : vector<200x256xf32>
    %c0_6 = arith.constant 0 : index
    %c0_7 = arith.constant 0 : index
    %8 = vector.load %arg4[%c0_6, %c0_7] : memref<200x200xbf16, #tpu.memory_space<vmem>>, vector<200x200xbf16>
    %9 = arith.truncf %7 : vector<200x256xf32> to vector<200x256xbf16>
    %cst_8 = arith.constant dense<0.000000e+00> : vector<200x256xf32>
    %10 = tpu.matmul %8, %9, %cst_8 {dimension_numbers = #tpu.dot_dimension_numbers<[1], [0], [0], [1], [0, 0, 1, 1], [], []>} : vector<200x200xbf16>, vector<200x256xbf16>, vector<200x256xf32> -> vector<200x256xf32>
    %c0_9 = arith.constant 0 : index
    %c0_10 = arith.constant 0 : index
    %11 = vector.load %arg5[%c0_9, %c0_10] : memref<200x1xf32, #tpu.memory_space<vmem>>, vector<200x1xf32>
    %12 = vector.broadcast %11 : vector<200x1xf32> to vector<200x256xf32>
    %13 = arith.addf %10, %12 : vector<200x256xf32>
    %cst_11 = arith.constant 0.000000e+00 : f32
    %14 = vector.broadcast %cst_11 : f32 to vector<200x256xf32>
    %15 = arith.maximumf %13, %14 : vector<200x256xf32>
    %c0_12 = arith.constant 0 : index
    %c0_13 = arith.constant 0 : index
    %16 = vector.load %arg6[%c0_12, %c0_13] : memref<200x200xbf16, #tpu.memory_space<vmem>>, vector<200x200xbf16>
    %17 = arith.truncf %15 : vector<200x256xf32> to vector<200x256xbf16>
    %cst_14 = arith.constant dense<0.000000e+00> : vector<200x256xf32>
    %18 = tpu.matmul %16, %17, %cst_14 {dimension_numbers = #tpu.dot_dimension_numbers<[1], [0], [0], [1], [0, 0, 1, 1], [], []>} : vector<200x200xbf16>, vector<200x256xbf16>, vector<200x256xf32> -> vector<200x256xf32>
    %c0_15 = arith.constant 0 : index
    %c0_16 = arith.constant 0 : index
    %19 = vector.load %arg7[%c0_15, %c0_16] : memref<200x1xf32, #tpu.memory_space<vmem>>, vector<200x1xf32>
    %20 = vector.broadcast %19 : vector<200x1xf32> to vector<200x256xf32>
    %21 = arith.addf %18, %20 : vector<200x256xf32>
    %cst_17 = arith.constant 0.000000e+00 : f32
    %22 = vector.broadcast %cst_17 : f32 to vector<200x256xf32>
    %23 = arith.maximumf %21, %22 : vector<200x256xf32>
    %c0_18 = arith.constant 0 : index
    %c0_19 = arith.constant 0 : index
    %24 = vector.load %arg8[%c0_18, %c0_19] : memref<2x200xbf16, #tpu.memory_space<vmem>>, vector<2x200xbf16>
    %25 = arith.truncf %23 : vector<200x256xf32> to vector<200x256xbf16>
    %cst_20 = arith.constant dense<0.000000e+00> : vector<2x256xf32>
    %26 = tpu.matmul %24, %25, %cst_20 {dimension_numbers = #tpu.dot_dimension_numbers<[1], [0], [0], [1], [0, 0, 1, 1], [], []>} : vector<2x200xbf16>, vector<200x256xbf16>, vector<2x256xf32> -> vector<2x256xf32>
    %c0_21 = arith.constant 0 : index
    %c0_22 = arith.constant 0 : index
    %27 = vector.load %arg9[%c0_21, %c0_22] : memref<2x1xf32, #tpu.memory_space<vmem>>, vector<2x1xf32>
    %28 = vector.broadcast %27 : vector<2x1xf32> to vector<2x256xf32>
    %29 = arith.addf %26, %28 : vector<2x256xf32>
    %30 = math.tanh %29 : vector<2x256xf32>
    %c0_23 = arith.constant 0 : index
    %c0_24 = arith.constant 0 : index
    %31 = vector.load %arg10[%c0_23, %c0_24] : memref<2x256xf32, #tpu.memory_space<vmem>>, vector<2x256xf32>
    tpu.vector_store %arg10[%c0_23, %c0_24], %30 {strides = array<i32>} : memref<2x256xf32, #tpu.memory_space<vmem>>, vector<2x256xf32>,
    return
  }
  func.func @transform_0(%arg0: i32) -> (i32, i32) {
    %c0_i32 = arith.constant 0 : i32
    %c0_i32_0 = arith.constant 0 : i32
    return %c0_i32, %arg0 : i32, i32
  }
  func.func @transform_1(%arg0: i32) -> (i32, i32) {
    %c0_i32 = arith.constant 0 : i32
    %c0_i32_0 = arith.constant 0 : i32
    %c0_i32_1 = arith.constant 0 : i32
    return %c0_i32, %c0_i32_0 : i32, i32
  }
  func.func @transform_2(%arg0: i32) -> (i32, i32) {
    %c0_i32 = arith.constant 0 : i32
    %c0_i32_0 = arith.constant 0 : i32
    %c0_i32_1 = arith.constant 0 : i32
    return %c0_i32, %c0_i32_0 : i32, i32
  }
  func.func @transform_3(%arg0: i32) -> (i32, i32) {
    %c0_i32 = arith.constant 0 : i32
    %c0_i32_0 = arith.constant 0 : i32
    %c0_i32_1 = arith.constant 0 : i32
    return %c0_i32, %c0_i32_0 : i32, i32
  }
  func.func @transform_4(%arg0: i32) -> (i32, i32) {
    %c0_i32 = arith.constant 0 : i32
    %c0_i32_0 = arith.constant 0 : i32
    %c0_i32_1 = arith.constant 0 : i32
    return %c0_i32, %c0_i32_0 : i32, i32
  }
  func.func @transform_5(%arg0: i32) -> (i32, i32) {
    %c0_i32 = arith.constant 0 : i32
    %c0_i32_0 = arith.constant 0 : i32
    %c0_i32_1 = arith.constant 0 : i32
    return %c0_i32, %c0_i32_0 : i32, i32
  }
  func.func @transform_6(%arg0: i32) -> (i32, i32) {
    %c0_i32 = arith.constant 0 : i32
    %c0_i32_0 = arith.constant 0 : i32
    %c0_i32_1 = arith.constant 0 : i32
    return %c0_i32, %c0_i32_0 : i32, i32
  }
  func.func @transform_7(%arg0: i32) -> (i32, i32) {
    %c0_i32 = arith.constant 0 : i32
    %c0_i32_0 = arith.constant 0 : i32
    %c0_i32_1 = arith.constant 0 : i32
    return %c0_i32, %c0_i32_0 : i32, i32
  }
  func.func @transform_8(%arg0: i32) -> (i32, i32) {
    %c0_i32 = arith.constant 0 : i32
    %c0_i32_0 = arith.constant 0 : i32
    %c0_i32_1 = arith.constant 0 : i32
    return %c0_i32, %c0_i32_0 : i32, i32
  }
  func.func @transform_9(%arg0: i32) -> (i32, i32) {
    %c0_i32 = arith.constant 0 : i32
    %c0_i32_0 = arith.constant 0 : i32
    return %c0_i32, %arg0 : i32, i32
  }
}

</mosaic_0001>

<llo_original>
// kernel: actor_forward.1
$region0: #{actor_forward.1}
  #allocation0 [shape = 'u32[]', space=smem, size = 0x4, offset = 0x4, fixed_abs, tag = 'smem constant byte address 0x4 - core index']
  #allocation1 [shape = 'u32[72,128]{1,0:T(1,128)}', space=vmem, size = 0x9000, scoped, tag = 'internal scratch']
  %s0 = inlined_call_operand.vmem [shape: bf16[32,256], index: 0, kind: input, shape index: {}]
  %s1 = inlined_call_operand.vmem [shape: bf16[200,32], index: 1, kind: input, shape index: {}]
  %s2 = inlined_call_operand.vmem [shape: f32[200,1], index: 2, kind: input, shape index: {}]
  %s3 = inlined_call_operand.vmem [shape: bf16[200,200], index: 3, kind: input, shape index: {}]
  %s4 = inlined_call_operand.vmem [shape: f32[200,1], index: 4, kind: input, shape index: {}]
  %s5 = inlined_call_operand.vmem [shape: bf16[200,200], index: 5, kind: input, shape index: {}]
  %s6 = inlined_call_operand.vmem [shape: f32[200,1], index: 6, kind: input, shape index: {}]
  %s7 = inlined_call_operand.vmem [shape: bf16[2,200], index: 7, kind: input, shape index: {}]
  %s8 = inlined_call_operand.vmem [shape: f32[2,1], index: 8, kind: input, shape index: {}]
  %s9 = inlined_call_operand.vmem [shape: f32[2,256], index: 9, kind: output, shape index: {}]
  %s10 = sld [smem:[#allocation0]]
  $region46: #{actor_forward.1} parent=0
    _
  %s12 = ssub.s32 1, %s10
  %s13 = scalar_select 0, %s12, %s10
  // Predicated region
  $region2: #{actor_forward.1} parent=0 // pred_check
    _
  $region3: #{actor_forward.1} parent=0 // pred_check_branch
    %15 = sbr.rel (0) target = $region5
  $region4: #{actor_forward.1} parent=0 // pred_region
    _
  $region5: #{actor_forward.1} parent=0 // pred_fallthru
    _
  // Predicated region
  $region6: #{actor_forward.1} parent=0 // pred_check
    _
  $region7: #{actor_forward.1} parent=0 // pred_check_branch
    %17 = sbr.rel (0) target = $region9
  $region8: #{actor_forward.1} parent=0 // pred_region
    _
  $region9: #{actor_forward.1} parent=0 // pred_fallthru
    _
  // Predicated region
  $region10: #{actor_forward.1} parent=0 // pred_check
    _
  $region11: #{actor_forward.1} parent=0 // pred_check_branch
    %19 = sbr.rel (0) target = $region13
  $region12: #{actor_forward.1} parent=0 // pred_region
    _
  $region13: #{actor_forward.1} parent=0 // pred_fallthru
    _
  // Predicated region
  $region14: #{actor_forward.1} parent=0 // pred_check
    _
  $region15: #{actor_forward.1} parent=0 // pred_check_branch
    %21 = sbr.rel (0) target = $region17
  $region16: #{actor_forward.1} parent=0 // pred_region
    _
  $region17: #{actor_forward.1} parent=0 // pred_fallthru
    _
  // Predicated region
  $region18: #{actor_forward.1} parent=0 // pred_check
    _
  $region19: #{actor_forward.1} parent=0 // pred_check_branch
    %23 = sbr.rel (0) target = $region21
  $region20: #{actor_forward.1} parent=0 // pred_region
    _
  $region21: #{actor_forward.1} parent=0 // pred_fallthru
    _
  // Predicated region
  $region22: #{actor_forward.1} parent=0 // pred_check
    _
  $region23: #{actor_forward.1} parent=0 // pred_check_branch
    %25 = sbr.rel (0) target = $region25
  $region24: #{actor_forward.1} parent=0 // pred_region
    _
  $region25: #{actor_forward.1} parent=0 // pred_fallthru
    _
  // Predicated region
  $region26: #{actor_forward.1} parent=0 // pred_check
    _
  $region27: #{actor_forward.1} parent=0 // pred_check_branch
    %27 = sbr.rel (0) target = $region29
  $region28: #{actor_forward.1} parent=0 // pred_region
    _
  $region29: #{actor_forward.1} parent=0 // pred_fallthru
    _
  // Predicated region
  $region30: #{actor_forward.1} parent=0 // pred_check
    _
  $region31: #{actor_forward.1} parent=0 // pred_check_branch
    %29 = sbr.rel (0) target = $region33
  $region32: #{actor_forward.1} parent=0 // pred_region
    _
  $region33: #{actor_forward.1} parent=0 // pred_fallthru
    _
  // Predicated region
  $region34: #{actor_forward.1} parent=0 // pred_check
    _
  $region35: #{actor_forward.1} parent=0 // pred_check_branch
    %31 = sbr.rel (0) target = $region37
  $region36: #{actor_forward.1} parent=0 // pred_region
    _
  $region37: #{actor_forward.1} parent=0 // pred_fallthru
    _
  %v33 = vld [vmem:[%s0] sm:$0xff]
  %v34 = vld [vmem:[%s0 + $0x8] sm:$0xff]
  %v35 = vld [vmem:[%s0 + $0x10] sm:$0xff]
  %v36 = vld [vmem:[%s0 + $0x18] sm:$0xff]
  %v37 = vld [vmem:[%s1] sm:$0xf]
  %v38 = vld [vmem:[%s1 + $0x4] sm:$0xf]
  %v39 = vld [vmem:[%s1 + $0x8] sm:$0xf]
  %v40 = vld [vmem:[%s1 + $0xc] sm:$0xf]
  %v41 = vld [vmem:[%s1 + $0x10] sm:$0xf]
  %v42 = vld [vmem:[%s1 + $0x14] sm:$0xf]
  %v43 = vld [vmem:[%s1 + $0x18] sm:$0xf]
  %v44 = vld [vmem:[%s1 + $0x1c] sm:$0xf]
  %v45 = vld [vmem:[%s1 + $0x20] sm:$0xf]
  %v46 = vld [vmem:[%s1 + $0x24] sm:$0xf]
  %v47 = vld [vmem:[%s1 + $0x28] sm:$0xf]
  %v48 = vld [vmem:[%s1 + $0x2c] sm:$0xf]
  %v49 = vld [vmem:[%s1 + $0x30] sm:$0xf]
  %v50 = vld [vmem:[%s1 + $0x34] sm:$0xf]
  %v51 = vld [vmem:[%s1 + $0x38] sm:$0xf]
  %v52 = vld [vmem:[%s1 + $0x3c] sm:$0xf]
  %v53 = vld [vmem:[%s1 + $0x40] sm:$0xf]
  %v54 = vld [vmem:[%s1 + $0x44] sm:$0xf]
  %v55 = vld [vmem:[%s1 + $0x48] sm:$0xf]
  %v56 = vld [vmem:[%s1 + $0x4c] sm:$0xf]
  %v57 = vld [vmem:[%s1 + $0x50] sm:$0xf]
  %v58 = vld [vmem:[%s1 + $0x54] sm:$0xf]
  %v59 = vld [vmem:[%s1 + $0x58] sm:$0xf]
  %v60 = vld [vmem:[%s1 + $0x5c] sm:$0xf]
  %v61 = vld [vmem:[%s1 + $0x60] sm:$0xf]
  %v62 = vld [vmem:[%s2] sm:$0xff]
  %v63 = vld [vmem:[%s2 + $0x8] sm:$0xff]
  %v64 = vld [vmem:[%s2 + $0x10] sm:$0xff]
  %v65 = vld [vmem:[%s2 + $0x18] sm:$0xff]
  %v66 = vld [vmem:[%s2 + $0x20] sm:$0xff]
  %v67 = vld [vmem:[%s2 + $0x28] sm:$0xff]
  %v68 = vld [vmem:[%s2 + $0x30] sm:$0xff]
  %v69 = vld [vmem:[%s2 + $0x38] sm:$0xff]
  %v70 = vld [vmem:[%s2 + $0x40] sm:$0xff]
  %v71 = vld [vmem:[%s2 + $0x48] sm:$0xff]
  %v72 = vld [vmem:[%s2 + $0x50] sm:$0xff]
  %v73 = vld [vmem:[%s2 + $0x58] sm:$0xff]
  %v74 = vld [vmem:[%s2 + $0x60] sm:$0xff]
  %v75 = vld [vmem:[%s2 + $0x68] sm:$0xff]
  %v76 = vld [vmem:[%s2 + $0x70] sm:$0xff]
  %v77 = vld [vmem:[%s2 + $0x78] sm:$0xff]
  %v78 = vld [vmem:[%s2 + $0x80] sm:$0xff]
  %v79 = vld [vmem:[%s2 + $0x88] sm:$0xff]
  %v80 = vld [vmem:[%s2 + $0x90] sm:$0xff]
  %v81 = vld [vmem:[%s2 + $0x98] sm:$0xff]
  %v82 = vld [vmem:[%s2 + $0xa0] sm:$0xff]
  %v83 = vld [vmem:[%s2 + $0xa8] sm:$0xff]
  %v84 = vld [vmem:[%s2 + $0xb0] sm:$0xff]
  %v85 = vld [vmem:[%s2 + $0xb8] sm:$0xff]
  %v86 = vld [vmem:[%s2 + $0xc0] sm:$0xff]
  %88 = vset.pattern.permute.xlu0 0
  %89 = vperm.xlu0 %88, %v62
  %v90 = vpop.permute.xlu0 %89
  %93 = vset.pattern.permute.xlu0 0
  %94 = vperm.xlu0 %93, %v63
  %v95 = vpop.permute.xlu0 %94
  %98 = vset.pattern.permute.xlu0 0
  %99 = vperm.xlu0 %98, %v64
  %v100 = vpop.permute.xlu0 %99
  %103 = vset.pattern.permute.xlu0 0
  %104 = vperm.xlu0 %103, %v65
  %v105 = vpop.permute.xlu0 %104
  %108 = vset.pattern.permute.xlu0 0
  %109 = vperm.xlu0 %108, %v66
  %v110 = vpop.permute.xlu0 %109
  %113 = vset.pattern.permute.xlu0 0
  %114 = vperm.xlu0 %113, %v67
  %v115 = vpop.permute.xlu0 %114
  %118 = vset.pattern.permute.xlu0 0
  %119 = vperm.xlu0 %118, %v68
  %v120 = vpop.permute.xlu0 %119
  %123 = vset.pattern.permute.xlu0 0
  %124 = vperm.xlu0 %123, %v69
  %v125 = vpop.permute.xlu0 %124
  %128 = vset.pattern.permute.xlu0 0
  %129 = vperm.xlu0 %128, %v70
  %v130 = vpop.permute.xlu0 %129
  %133 = vset.pattern.permute.xlu0 0
  %134 = vperm.xlu0 %133, %v71
  %v135 = vpop.permute.xlu0 %134
  %138 = vset.pattern.permute.xlu0 0
  %139 = vperm.xlu0 %138, %v72
  %v140 = vpop.permute.xlu0 %139
  %143 = vset.pattern.permute.xlu0 0
  %144 = vperm.xlu0 %143, %v73
  %v145 = vpop.permute.xlu0 %144
  %148 = vset.pattern.permute.xlu0 0
  %149 = vperm.xlu0 %148, %v74
  %v150 = vpop.permute.xlu0 %149
  %153 = vset.pattern.permute.xlu0 0
  %154 = vperm.xlu0 %153, %v75
  %v155 = vpop.permute.xlu0 %154
  %158 = vset.pattern.permute.xlu0 0
  %159 = vperm.xlu0 %158, %v76
  %v160 = vpop.permute.xlu0 %159
  %163 = vset.pattern.permute.xlu0 0
  %164 = vperm.xlu0 %163, %v77
  %v165 = vpop.permute.xlu0 %164
  %168 = vset.pattern.permute.xlu0 0
  %169 = vperm.xlu0 %168, %v78
  %v170 = vpop.permute.xlu0 %169
  %173 = vset.pattern.permute.xlu0 0
  %174 = vperm.xlu0 %173, %v79
  %v175 = vpop.permute.xlu0 %174
  %178 = vset.pattern.permute.xlu0 0
  %179 = vperm.xlu0 %178, %v80
  %v180 = vpop.permute.xlu0 %179
  %183 = vset.pattern.permute.xlu0 0
  %184 = vperm.xlu0 %183, %v81
  %v185 = vpop.permute.xlu0 %184
  %188 = vset.pattern.permute.xlu0 0
  %189 = vperm.xlu0 %188, %v82
  %v190 = vpop.permute.xlu0 %189
  %193 = vset.pattern.permute.xlu0 0
  %194 = vperm.xlu0 %193, %v83
  %v195 = vpop.permute.xlu0 %194
  %198 = vset.pattern.permute.xlu0 0
  %199 = vperm.xlu0 %198, %v84
  %v200 = vpop.permute.xlu0 %199
  %203 = vset.pattern.permute.xlu0 0
  %204 = vperm.xlu0 %203, %v85
  %v205 = vpop.permute.xlu0 %204
  %208 = vset.pattern.permute.xlu0 0
  %209 = vperm.xlu0 %208, %v86
  %v210 = vpop.permute.xlu0 %209
  %v237 = vunpack.c.l.b16 %v37
  %v238 = vunpack.c.l.b16 %v38
  %v239 = vunpack.c.l.b16 %v39
  %v240 = vunpack.c.l.b16 %v40
  %v241 = vunpack.c.l.b16 %v41
  %v242 = vunpack.c.l.b16 %v42
  %v243 = vunpack.c.l.b16 %v43
  %v244 = vunpack.c.l.b16 %v44
  %v245 = vunpack.c.l.b16 %v45
  %v246 = vunpack.c.l.b16 %v46
  %v247 = vunpack.c.l.b16 %v47
  %v248 = vunpack.c.l.b16 %v48
  %v249 = vunpack.c.l.b16 %v49
  %v250 = vunpack.c.l.b16 %v50
  %v251 = vunpack.c.l.b16 %v51
  %v252 = vunpack.c.l.b16 %v52
  %v253 = vunpack.c.l.b16 %v53
  %v254 = vunpack.c.l.b16 %v54
  %v255 = vunpack.c.l.b16 %v55
  %v256 = vunpack.c.l.b16 %v56
  %v257 = vunpack.c.l.b16 %v57
  %v258 = vunpack.c.l.b16 %v58
  %v259 = vunpack.c.l.b16 %v59
  %v260 = vunpack.c.l.b16 %v60
  %v261 = vunpack.c.l.b16 %v61
  %v262 = vpack.c.b16 %v238, %v237
  %v263 = vpack.c.b16 %v240, %v239
  %v264 = vpack.c.b16 %v242, %v241
  %v265 = vpack.c.b16 %v244, %v243
  %v266 = vpack.c.b16 %v246, %v245
  %v267 = vpack.c.b16 %v248, %v247
  %v268 = vpack.c.b16 %v250, %v249
  %v269 = vpack.c.b16 %v252, %v251
  %v270 = vpack.c.b16 %v254, %v253
  %v271 = vpack.c.b16 %v256, %v255
  %v272 = vpack.c.b16 %v258, %v257
  %v273 = vpack.c.b16 %v260, %v259
  %v274 = vpack.c.b16 %v261, %v261
  %v279 = vunpack.c.l.b16 %v33
  %v280 = vunpack.c.h.b16 %v33
  %v281 = vunpack.c.l.b16 %v34
  %v282 = vunpack.c.h.b16 %v34
  %v283 = vunpack.c.l.b16 %v35
  %v284 = vunpack.c.h.b16 %v35
  %v285 = vunpack.c.l.b16 %v36
  %v286 = vunpack.c.h.b16 %v36
  %v287 = vpack.c.b16 %v281, %v279
  %v288 = vpack.c.b16 %v282, %v280
  %v289 = vpack.c.b16 %v285, %v283
  %v290 = vpack.c.b16 %v286, %v284
  %vm295 = vcmask 261120
  %v297 = vsel %vm295, %v262, 0
  %v300 = vsel %vm295, %v263, 0
  %v303 = vsel %vm295, %v264, 0
  %v306 = vsel %vm295, %v265, 0
  %v309 = vsel %vm295, %v266, 0
  %v312 = vsel %vm295, %v267, 0
  %v315 = vsel %vm295, %v268, 0
  %v318 = vsel %vm295, %v269, 0
  %v321 = vsel %vm295, %v270, 0
  %v324 = vsel %vm295, %v271, 0
  %v327 = vsel %vm295, %v272, 0
  %v330 = vsel %vm295, %v273, 0
  %v333 = vsel %vm295, %v274, 0
  %335 = vmatpush.bf16.msra.mxu0 0
  %336 = vmatpush.bf16.msra.mxu0 0
  %337 = vmatpush.bf16.msra.mxu0 0
  %338 = vmatpush.bf16.msra.mxu0 0
  %339 = vmatpush.bf16.msra.mxu0 0
  %340 = vmatpush.bf16.msra.mxu0 0
  %341 = vmatpush.bf16.msra.mxu0 %v289
  %342 = vmatpush.bf16.msra.mxu0 %v287
  %343 = vmatmul.bf16.gmra.mxu0 %v297
  %v344 = vpop.f32.mrf.mxu0
  %v345 = vadd.f32 %v90, %v344
  %v346 = vpop.f32.mrf.mxu0
  %v347 = vadd.f32 %v95, %v346
  %348 = vmatmul.bf16.gmra.mxu0 %v300
  %v349 = vpop.f32.mrf.mxu0
  %v350 = vadd.f32 %v100, %v349
  %v351 = vpop.f32.mrf.mxu0
  %v352 = vadd.f32 %v105, %v351
  %353 = vmatmul.bf16.gmra.mxu0 %v303
  %v354 = vpop.f32.mrf.mxu0
  %v355 = vadd.f32 %v110, %v354
  %v356 = vpop.f32.mrf.mxu0
  %v357 = vadd.f32 %v115, %v356
  %358 = vmatmul.bf16.gmra.mxu0 %v306
  %v359 = vpop.f32.mrf.mxu0
  %v360 = vadd.f32 %v120, %v359
  %v361 = vpop.f32.mrf.mxu0
  %v362 = vadd.f32 %v125, %v361
  %363 = vmatmul.bf16.gmra.mxu0 %v309
  %v364 = vpop.f32.mrf.mxu0
  %v365 = vadd.f32 %v130, %v364
  %v366 = vpop.f32.mrf.mxu0
  %v367 = vadd.f32 %v135, %v366
  %368 = vmatmul.bf16.gmra.mxu0 %v312
  %v369 = vpop.f32.mrf.mxu0
  %v370 = vadd.f32 %v140, %v369
  %v371 = vpop.f32.mrf.mxu0
  %v372 = vadd.f32 %v145, %v371
  %373 = vmatmul.bf16.gmra.mxu0 %v315
  %v374 = vpop.f32.mrf.mxu0
  %v375 = vadd.f32 %v150, %v374
  %v376 = vpop.f32.mrf.mxu0
  %v377 = vadd.f32 %v155, %v376
  %378 = vmatmul.bf16.gmra.mxu0 %v318
  %v379 = vpop.f32.mrf.mxu0
  %v380 = vadd.f32 %v160, %v379
  %v381 = vpop.f32.mrf.mxu0
  %v382 = vadd.f32 %v165, %v381
  %383 = vmatmul.bf16.gmra.mxu0 %v321
  %v384 = vpop.f32.mrf.mxu0
  %v385 = vadd.f32 %v170, %v384
  %v386 = vpop.f32.mrf.mxu0
  %v387 = vadd.f32 %v175, %v386
  %388 = vmatmul.bf16.gmra.mxu0 %v324
  %v389 = vpop.f32.mrf.mxu0
  %v390 = vadd.f32 %v180, %v389
  %v391 = vpop.f32.mrf.mxu0
  %v392 = vadd.f32 %v185, %v391
  %393 = vmatmul.bf16.gmra.mxu0 %v327
  %v394 = vpop.f32.mrf.mxu0
  %v395 = vadd.f32 %v190, %v394
  %v396 = vpop.f32.mrf.mxu0
  %v397 = vadd.f32 %v195, %v396
  %398 = vmatmul.bf16.gmra.mxu0 %v330
  %v399 = vpop.f32.mrf.mxu0
  %v400 = vadd.f32 %v200, %v399
  %v401 = vpop.f32.mrf.mxu0
  %v402 = vadd.f32 %v205, %v401
  %403 = vmatmul.bf16.gmra.mxu0 %v333
  %v404 = vpop.f32.mrf.mxu0
  %v405 = vadd.f32 %v210, %v404
  %v406 = vpop.f32.mrf.mxu0
  %407 = vdwg.mxu0
  %408 = vmatpush.bf16.msra.mxu0 0
  %409 = vmatpush.bf16.msra.mxu0 0
  %410 = vmatpush.bf16.msra.mxu0 0
  %411 = vmatpush.bf16.msra.mxu0 0
  %412 = vmatpush.bf16.msra.mxu0 0
  %413 = vmatpush.bf16.msra.mxu0 0
  %414 = vmatpush.bf16.msra.mxu0 %v290
  %415 = vmatpush.bf16.msra.mxu0 %v288
  %416 = vmatmul.bf16.gmra.mxu0 %v297
  %v417 = vpop.f32.mrf.mxu0
  %v418 = vadd.f32 %v90, %v417
  %v419 = vpop.f32.mrf.mxu0
  %v420 = vadd.f32 %v95, %v419
  %421 = vmatmul.bf16.gmra.mxu0 %v300
  %v422 = vpop.f32.mrf.mxu0
  %v423 = vadd.f32 %v100, %v422
  %v424 = vpop.f32.mrf.mxu0
  %v425 = vadd.f32 %v105, %v424
  %426 = vmatmul.bf16.gmra.mxu0 %v303
  %v427 = vpop.f32.mrf.mxu0
  %v428 = vadd.f32 %v110, %v427
  %v429 = vpop.f32.mrf.mxu0
  %v430 = vadd.f32 %v115, %v429
  %431 = vmatmul.bf16.gmra.mxu0 %v306
  %v432 = vpop.f32.mrf.mxu0
  %v433 = vadd.f32 %v120, %v432
  %v434 = vpop.f32.mrf.mxu0
  %v435 = vadd.f32 %v125, %v434
  %436 = vmatmul.bf16.gmra.mxu0 %v309
  %v437 = vpop.f32.mrf.mxu0
  %v438 = vadd.f32 %v130, %v437
  %v439 = vpop.f32.mrf.mxu0
  %v440 = vadd.f32 %v135, %v439
  %441 = vmatmul.bf16.gmra.mxu0 %v312
  %v442 = vpop.f32.mrf.mxu0
  %v443 = vadd.f32 %v140, %v442
  %v444 = vpop.f32.mrf.mxu0
  %v445 = vadd.f32 %v145, %v444
  %446 = vmatmul.bf16.gmra.mxu0 %v315
  %v447 = vpop.f32.mrf.mxu0
  %v448 = vadd.f32 %v150, %v447
  %v449 = vpop.f32.mrf.mxu0
  %v450 = vadd.f32 %v155, %v449
  %451 = vmatmul.bf16.gmra.mxu0 %v318
  %v452 = vpop.f32.mrf.mxu0
  %v453 = vadd.f32 %v160, %v452
  %v454 = vpop.f32.mrf.mxu0
  %v455 = vadd.f32 %v165, %v454
  %456 = vmatmul.bf16.gmra.mxu0 %v321
  %v457 = vpop.f32.mrf.mxu0
  %v458 = vadd.f32 %v170, %v457
  %v459 = vpop.f32.mrf.mxu0
  %v460 = vadd.f32 %v175, %v459
  %461 = vmatmul.bf16.gmra.mxu0 %v324
  %v462 = vpop.f32.mrf.mxu0
  %v463 = vadd.f32 %v180, %v462
  %v464 = vpop.f32.mrf.mxu0
  %v465 = vadd.f32 %v185, %v464
  %466 = vmatmul.bf16.gmra.mxu0 %v327
  %v467 = vpop.f32.mrf.mxu0
  %v468 = vadd.f32 %v190, %v467
  %v469 = vpop.f32.mrf.mxu0
  %v470 = vadd.f32 %v195, %v469
  %471 = vmatmul.bf16.gmra.mxu0 %v330
  %v472 = vpop.f32.mrf.mxu0
  %v473 = vadd.f32 %v200, %v472
  %v474 = vpop.f32.mrf.mxu0
  %v475 = vadd.f32 %v205, %v474
  %476 = vmatmul.bf16.gmra.mxu0 %v333
  %v477 = vpop.f32.mrf.mxu0
  %v478 = vadd.f32 %v210, %v477
  %v479 = vpop.f32.mrf.mxu0
  %480 = vdwg.mxu0
  %v481 = vmax.f32 %v345, 0.0
  %v482 = vmax.f32 %v418, 0.0
  %v483 = vmax.f32 %v347, 0.0
  %v484 = vmax.f32 %v420, 0.0
  %v485 = vmax.f32 %v350, 0.0
  %v486 = vmax.f32 %v423, 0.0
  %v487 = vmax.f32 %v352, 0.0
  %v488 = vmax.f32 %v425, 0.0
  %v489 = vmax.f32 %v355, 0.0
  %v490 = vmax.f32 %v428, 0.0
  %v491 = vmax.f32 %v357, 0.0
  %v492 = vmax.f32 %v430, 0.0
  %v493 = vmax.f32 %v360, 0.0
  %v494 = vmax.f32 %v433, 0.0
  %v495 = vmax.f32 %v362, 0.0
  %v496 = vmax.f32 %v435, 0.0
  %v497 = vmax.f32 %v365, 0.0
  %v498 = vmax.f32 %v438, 0.0
  %v499 = vmax.f32 %v367, 0.0
  %v500 = vmax.f32 %v440, 0.0
  %v501 = vmax.f32 %v370, 0.0
  %v502 = vmax.f32 %v443, 0.0
  %v503 = vmax.f32 %v372, 0.0
  %v504 = vmax.f32 %v445, 0.0
  %v505 = vmax.f32 %v375, 0.0
  %v506 = vmax.f32 %v448, 0.0
  %v507 = vmax.f32 %v377, 0.0
  %v508 = vmax.f32 %v450, 0.0
  %v509 = vmax.f32 %v380, 0.0
  %v510 = vmax.f32 %v453, 0.0
  %v511 = vmax.f32 %v382, 0.0
  %v512 = vmax.f32 %v455, 0.0
  %v513 = vmax.f32 %v385, 0.0
  %v514 = vmax.f32 %v458, 0.0
  %v515 = vmax.f32 %v387, 0.0
  %v516 = vmax.f32 %v460, 0.0
  %v517 = vmax.f32 %v390, 0.0
  %v518 = vmax.f32 %v463, 0.0
  %v519 = vmax.f32 %v392, 0.0
  %v520 = vmax.f32 %v465, 0.0
  %v521 = vmax.f32 %v395, 0.0
  %v522 = vmax.f32 %v468, 0.0
  %v523 = vmax.f32 %v397, 0.0
  %v524 = vmax.f32 %v470, 0.0
  %v525 = vmax.f32 %v400, 0.0
  %v526 = vmax.f32 %v473, 0.0
  %v527 = vmax.f32 %v402, 0.0
  %v528 = vmax.f32 %v475, 0.0
  %v529 = vmax.f32 %v405, 0.0
  %v530 = vmax.f32 %v478, 0.0
  %v531 = vld [vmem:[%s3] sm:$0xff]
  %v532 = vld [vmem:[%s3 + $0x8] sm:$0xff]
  %v533 = vld [vmem:[%s3 + $0x10] sm:$0xff]
  %v534 = vld [vmem:[%s3 + $0x18] sm:$0xff]
  %v535 = vld [vmem:[%s3 + $0x20] sm:$0xff]
  %v536 = vld [vmem:[%s3 + $0x28] sm:$0xff]
  %v537 = vld [vmem:[%s3 + $0x30] sm:$0xff]
  %v538 = vld [vmem:[%s3 + $0x38] sm:$0xff]
  %v539 = vld [vmem:[%s3 + $0x40] sm:$0xff]
  %v540 = vld [vmem:[%s3 + $0x48] sm:$0xff]
  %v541 = vld [vmem:[%s3 + $0x50] sm:$0xff]
  %v542 = vld [vmem:[%s3 + $0x58] sm:$0xff]
  %v543 = vld [vmem:[%s3 + $0x60] sm:$0xff]
  %v544 = vld [vmem:[%s3 + $0x68] sm:$0xff]
  %v545 = vld [vmem:[%s3 + $0x70] sm:$0xff]
  %v546 = vld [vmem:[%s3 + $0x78] sm:$0xff]
  %v547 = vld [vmem:[%s3 + $0x80] sm:$0xff]
  %v548 = vld [vmem:[%s3 + $0x88] sm:$0xff]
  %v549 = vld [vmem:[%s3 + $0x90] sm:$0xff]
  %v550 = vld [vmem:[%s3 + $0x98] sm:$0xff]
  %v551 = vld [vmem:[%s3 + $0xa0] sm:$0xff]
  %v552 = vld [vmem:[%s3 + $0xa8] sm:$0xff]
  %v553 = vld [vmem:[%s3 + $0xb0] sm:$0xff]
  %v554 = vld [vmem:[%s3 + $0xb8] sm:$0xff]
  %v555 = vld [vmem:[%s3 + $0xc0] sm:$0xff]
  %v556 = vpack.c.bf16 %v483, %v481
  %v557 = vpack.c.bf16 %v484, %v482
  %v558 = vpack.c.bf16 %v487, %v485
  %v559 = vpack.c.bf16 %v488, %v486
  %v560 = vpack.c.bf16 %v491, %v489
  %v561 = vpack.c.bf16 %v492, %v490
  %v562 = vpack.c.bf16 %v495, %v493
  %v563 = vpack.c.bf16 %v496, %v494
  %v564 = vpack.c.bf16 %v499, %v497
  %v565 = vpack.c.bf16 %v500, %v498
  %v566 = vpack.c.bf16 %v503, %v501
  %v567 = vpack.c.bf16 %v504, %v502
  %v568 = vpack.c.bf16 %v507, %v505
  %v569 = vpack.c.bf16 %v508, %v506
  %v570 = vpack.c.bf16 %v511, %v509
  %v571 = vpack.c.bf16 %v512, %v510
  %v572 = vpack.c.bf16 %v515, %v513
  %v573 = vpack.c.bf16 %v516, %v514
  %v574 = vpack.c.bf16 %v519, %v517
  %v575 = vpack.c.bf16 %v520, %v518
  %v576 = vpack.c.bf16 %v523, %v521
  %v577 = vpack.c.bf16 %v524, %v522
  %v578 = vpack.c.bf16 %v527, %v525
  %v579 = vpack.c.bf16 %v528, %v526
  %v580 = vpack.c.bf16 %v529, %v529
  %v581 = vpack.c.bf16 %v530, %v530
  %v582 = vld [vmem:[%s4] sm:$0xff]
  %v583 = vld [vmem:[%s4 + $0x8] sm:$0xff]
  %v584 = vld [vmem:[%s4 + $0x10] sm:$0xff]
  %v585 = vld [vmem:[%s4 + $0x18] sm:$0xff]
  %v586 = vld [vmem:[%s4 + $0x20] sm:$0xff]
  %v587 = vld [vmem:[%s4 + $0x28] sm:$0xff]
  %v588 = vld [vmem:[%s4 + $0x30] sm:$0xff]
  %v589 = vld [vmem:[%s4 + $0x38] sm:$0xff]
  %v590 = vld [vmem:[%s4 + $0x40] sm:$0xff]
  %v591 = vld [vmem:[%s4 + $0x48] sm:$0xff]
  %v592 = vld [vmem:[%s4 + $0x50] sm:$0xff]
  %v593 = vld [vmem:[%s4 + $0x58] sm:$0xff]
  %v594 = vld [vmem:[%s4 + $0x60] sm:$0xff]
  %v595 = vld [vmem:[%s4 + $0x68] sm:$0xff]
  %v596 = vld [vmem:[%s4 + $0x70] sm:$0xff]
  %v597 = vld [vmem:[%s4 + $0x78] sm:$0xff]
  %v598 = vld [vmem:[%s4 + $0x80] sm:$0xff]
  %v599 = vld [vmem:[%s4 + $0x88] sm:$0xff]
  %v600 = vld [vmem:[%s4 + $0x90] sm:$0xff]
  %v601 = vld [vmem:[%s4 + $0x98] sm:$0xff]
  %v602 = vld [vmem:[%s4 + $0xa0] sm:$0xff]
  %v603 = vld [vmem:[%s4 + $0xa8] sm:$0xff]
  %v604 = vld [vmem:[%s4 + $0xb0] sm:$0xff]
  %v605 = vld [vmem:[%s4 + $0xb8] sm:$0xff]
  %v606 = vld [vmem:[%s4 + $0xc0] sm:$0xff]
  %608 = vset.pattern.permute.xlu0 0
  %609 = vperm.xlu0 %608, %v582
  %v610 = vpop.permute.xlu0 %609
  %613 = vset.pattern.permute.xlu0 0
  %614 = vperm.xlu0 %613, %v583
  %v615 = vpop.permute.xlu0 %614
  %618 = vset.pattern.permute.xlu0 0
  %619 = vperm.xlu0 %618, %v584
  %v620 = vpop.permute.xlu0 %619
  %623 = vset.pattern.permute.xlu0 0
  %624 = vperm.xlu0 %623, %v585
  %v625 = vpop.permute.xlu0 %624
  %628 = vset.pattern.permute.xlu0 0
  %629 = vperm.xlu0 %628, %v586
  %v630 = vpop.permute.xlu0 %629
  %633 = vset.pattern.permute.xlu0 0
  %634 = vperm.xlu0 %633, %v587
  %v635 = vpop.permute.xlu0 %634
  %638 = vset.pattern.permute.xlu0 0
  %639 = vperm.xlu0 %638, %v588
  %v640 = vpop.permute.xlu0 %639
  %643 = vset.pattern.permute.xlu0 0
  %644 = vperm.xlu0 %643, %v589
  %v645 = vpop.permute.xlu0 %644
  %648 = vset.pattern.permute.xlu0 0
  %649 = vperm.xlu0 %648, %v590
  %v650 = vpop.permute.xlu0 %649
  %653 = vset.pattern.permute.xlu0 0
  %654 = vperm.xlu0 %653, %v591
  %v655 = vpop.permute.xlu0 %654
  %658 = vset.pattern.permute.xlu0 0
  %659 = vperm.xlu0 %658, %v592
  %v660 = vpop.permute.xlu0 %659
  %663 = vset.pattern.permute.xlu0 0
  %664 = vperm.xlu0 %663, %v593
  %v665 = vpop.permute.xlu0 %664
  %668 = vset.pattern.permute.xlu0 0
  %669 = vperm.xlu0 %668, %v594
  %v670 = vpop.permute.xlu0 %669
  %673 = vset.pattern.permute.xlu0 0
  %674 = vperm.xlu0 %673, %v595
  %v675 = vpop.permute.xlu0 %674
  %678 = vset.pattern.permute.xlu0 0
  %679 = vperm.xlu0 %678, %v596
  %v680 = vpop.permute.xlu0 %679
  %683 = vset.pattern.permute.xlu0 0
  %684 = vperm.xlu0 %683, %v597
  %v685 = vpop.permute.xlu0 %684
  %688 = vset.pattern.permute.xlu0 0
  %689 = vperm.xlu0 %688, %v598
  %v690 = vpop.permute.xlu0 %689
  %693 = vset.pattern.permute.xlu0 0
  %694 = vperm.xlu0 %693, %v599
  %v695 = vpop.permute.xlu0 %694
  %698 = vset.pattern.permute.xlu0 0
  %699 = vperm.xlu0 %698, %v600
  %v700 = vpop.permute.xlu0 %699
  %703 = vset.pattern.permute.xlu0 0
  %704 = vperm.xlu0 %703, %v601
  %v705 = vpop.permute.xlu0 %704
  %708 = vset.pattern.permute.xlu0 0
  %709 = vperm.xlu0 %708, %v602
  %v710 = vpop.permute.xlu0 %709
  %713 = vset.pattern.permute.xlu0 0
  %714 = vperm.xlu0 %713, %v603
  %v715 = vpop.permute.xlu0 %714
  %718 = vset.pattern.permute.xlu0 0
  %719 = vperm.xlu0 %718, %v604
  %v720 = vpop.permute.xlu0 %719
  %723 = vset.pattern.permute.xlu0 0
  %724 = vperm.xlu0 %723, %v605
  %v725 = vpop.permute.xlu0 %724
  %728 = vset.pattern.permute.xlu0 0
  %729 = vperm.xlu0 %728, %v606
  %v730 = vpop.permute.xlu0 %729
  %v757 = vunpack.c.l.b16 %v531
  %v758 = vunpack.c.h.b16 %v531
  %v759 = vunpack.c.l.b16 %v532
  %v760 = vunpack.c.h.b16 %v532
  %v761 = vunpack.c.l.b16 %v533
  %v762 = vunpack.c.h.b16 %v533
  %v763 = vunpack.c.l.b16 %v534
  %v764 = vunpack.c.h.b16 %v534
  %v765 = vunpack.c.l.b16 %v535
  %v766 = vunpack.c.h.b16 %v535
  %v767 = vunpack.c.l.b16 %v536
  %v768 = vunpack.c.h.b16 %v536
  %v769 = vunpack.c.l.b16 %v537
  %v770 = vunpack.c.h.b16 %v537
  %v771 = vunpack.c.l.b16 %v538
  %v772 = vunpack.c.h.b16 %v538
  %v773 = vunpack.c.l.b16 %v539
  %v774 = vunpack.c.h.b16 %v539
  %v775 = vunpack.c.l.b16 %v540
  %v776 = vunpack.c.h.b16 %v540
  %v777 = vunpack.c.l.b16 %v541
  %v778 = vunpack.c.h.b16 %v541
  %v779 = vunpack.c.l.b16 %v542
  %v780 = vunpack.c.h.b16 %v542
  %v781 = vunpack.c.l.b16 %v543
  %v782 = vunpack.c.h.b16 %v543
  %v783 = vunpack.c.l.b16 %v544
  %v784 = vunpack.c.h.b16 %v544
  %v785 = vunpack.c.l.b16 %v545
  %v786 = vunpack.c.h.b16 %v545
  %v787 = vunpack.c.l.b16 %v546
  %v788 = vunpack.c.h.b16 %v546
  %v789 = vunpack.c.l.b16 %v547
  %v790 = vunpack.c.h.b16 %v547
  %v791 = vunpack.c.l.b16 %v548
  %v792 = vunpack.c.h.b16 %v548
  %v793 = vunpack.c.l.b16 %v549
  %v794 = vunpack.c.h.b16 %v549
  %v795 = vunpack.c.l.b16 %v550
  %v796 = vunpack.c.h.b16 %v550
  %v797 = vunpack.c.l.b16 %v551
  %v798 = vunpack.c.h.b16 %v551
  %v799 = vunpack.c.l.b16 %v552
  %v800 = vunpack.c.h.b16 %v552
  %v801 = vunpack.c.l.b16 %v553
  %v802 = vunpack.c.h.b16 %v553
  %v803 = vunpack.c.l.b16 %v554
  %v804 = vunpack.c.h.b16 %v554
  %v805 = vunpack.c.l.b16 %v555
  %v806 = vunpack.c.h.b16 %v555
  %v807 = vpack.c.b16 %v759, %v757
  %v808 = vpack.c.b16 %v760, %v758
  %v809 = vpack.c.b16 %v763, %v761
  %v810 = vpack.c.b16 %v764, %v762
  %v811 = vpack.c.b16 %v767, %v765
  %v812 = vpack.c.b16 %v768, %v766
  %v813 = vpack.c.b16 %v771, %v769
  %v814 = vpack.c.b16 %v772, %v770
  %v815 = vpack.c.b16 %v775, %v773
  %v816 = vpack.c.b16 %v776, %v774
  %v817 = vpack.c.b16 %v779, %v777
  %v818 = vpack.c.b16 %v780, %v778
  %v819 = vpack.c.b16 %v783, %v781
  %v820 = vpack.c.b16 %v784, %v782
  %v821 = vpack.c.b16 %v787, %v785
  %v822 = vpack.c.b16 %v788, %v786
  %v823 = vpack.c.b16 %v791, %v789
  %v824 = vpack.c.b16 %v792, %v790
  %v825 = vpack.c.b16 %v795, %v793
  %v826 = vpack.c.b16 %v796, %v794
  %v827 = vpack.c.b16 %v799, %v797
  %v828 = vpack.c.b16 %v800, %v798
  %v829 = vpack.c.b16 %v803, %v801
  %v830 = vpack.c.b16 %v804, %v802
  %v831 = vpack.c.b16 %v805, %v805
  %v832 = vpack.c.b16 %v806, %v806
  %vm846 = vcmask 588800
  %v848 = vsel %vm846, %v808, 0
  %v851 = vsel %vm846, %v810, 0
  %v854 = vsel %vm846, %v812, 0
  %v857 = vsel %vm846, %v814, 0
  %v860 = vsel %vm846, %v816, 0
  %v863 = vsel %vm846, %v818, 0
  %v866 = vsel %vm846, %v820, 0
  %v869 = vsel %vm846, %v822, 0
  %v872 = vsel %vm846, %v824, 0
  %v875 = vsel %vm846, %v826, 0
  %v878 = vsel %vm846, %v828, 0
  %v881 = vsel %vm846, %v830, 0
  %v884 = vsel %vm846, %v832, 0
  %vm886 = vcmask 1043456
  %v888 = vsel %vm886, %v580, 0
  %v891 = vsel %vm886, %v581, 0
  %893 = vmatpush.bf16.msra.mxu0 %v570
  %894 = vmatpush.bf16.msra.mxu0 %v568
  %895 = vmatpush.bf16.msra.mxu0 %v566
  %896 = vmatpush.bf16.msra.mxu0 %v564
  %897 = vmatpush.bf16.msra.mxu0 %v562
  %898 = vmatpush.bf16.msra.mxu0 %v560
  %899 = vmatpush.bf16.msra.mxu0 %v558
  %900 = vmatpush.bf16.msra.mxu0 %v556
  %901 = vmatmul.bf16.gmra.mxu0 %v807
  %v902 = vpop.f32.mrf.mxu0
  %v903 = vadd.f32 %v610, %v902
  %v904 = vpop.f32.mrf.mxu0
  %v905 = vadd.f32 %v615, %v904
  %906 = vmatmul.bf16.gmra.mxu0 %v809
  %v907 = vpop.f32.mrf.mxu0
  %v908 = vadd.f32 %v620, %v907
  %v909 = vpop.f32.mrf.mxu0
  %v910 = vadd.f32 %v625, %v909
  %911 = vmatmul.bf16.gmra.mxu0 %v811
  %v912 = vpop.f32.mrf.mxu0
  %v913 = vadd.f32 %v630, %v912
  %v914 = vpop.f32.mrf.mxu0
  %v915 = vadd.f32 %v635, %v914
  %916 = vmatmul.bf16.gmra.mxu0 %v813
  %v917 = vpop.f32.mrf.mxu0
  %v918 = vadd.f32 %v640, %v917
  %v919 = vpop.f32.mrf.mxu0
  %v920 = vadd.f32 %v645, %v919
  %921 = vmatmul.bf16.gmra.mxu0 %v815
  %v922 = vpop.f32.mrf.mxu0
  %v923 = vadd.f32 %v650, %v922
  %v924 = vpop.f32.mrf.mxu0
  %v925 = vadd.f32 %v655, %v924
  %926 = vmatmul.bf16.gmra.mxu0 %v817
  %v927 = vpop.f32.mrf.mxu0
  %v928 = vadd.f32 %v660, %v927
  %v929 = vpop.f32.mrf.mxu0
  %v930 = vadd.f32 %v665, %v929
  %931 = vmatmul.bf16.gmra.mxu0 %v819
  %v932 = vpop.f32.mrf.mxu0
  %v933 = vadd.f32 %v670, %v932
  %v934 = vpop.f32.mrf.mxu0
  %v935 = vadd.f32 %v675, %v934
  %936 = vmatmul.bf16.gmra.mxu0 %v821
  %v937 = vpop.f32.mrf.mxu0
  %v938 = vadd.f32 %v680, %v937
  %v939 = vpop.f32.mrf.mxu0
  %v940 = vadd.f32 %v685, %v939
  %941 = vmatmul.bf16.gmra.mxu0 %v823
  %v942 = vpop.f32.mrf.mxu0
  %v943 = vadd.f32 %v690, %v942
  %v944 = vpop.f32.mrf.mxu0
  %v945 = vadd.f32 %v695, %v944
  %946 = vmatmul.bf16.gmra.mxu0 %v825
  %v947 = vpop.f32.mrf.mxu0
  %v948 = vadd.f32 %v700, %v947
  %v949 = vpop.f32.mrf.mxu0
  %v950 = vadd.f32 %v705, %v949
  %951 = vmatmul.bf16.gmra.mxu0 %v827
  %v952 = vpop.f32.mrf.mxu0
  %v953 = vadd.f32 %v710, %v952
  %v954 = vpop.f32.mrf.mxu0
  %v955 = vadd.f32 %v715, %v954
  %956 = vmatmul.bf16.gmra.mxu0 %v829
  %v957 = vpop.f32.mrf.mxu0
  %v958 = vadd.f32 %v720, %v957
  %v959 = vpop.f32.mrf.mxu0
  %v960 = vadd.f32 %v725, %v959
  %961 = vmatmul.bf16.gmra.mxu0 %v831
  %v962 = vpop.f32.mrf.mxu0
  %v963 = vadd.f32 %v730, %v962
  %v964 = vpop.f32.mrf.mxu0
  %965 = vdwg.mxu0
  %966 = vmatpush.bf16.msra.mxu0 0
  %967 = vmatpush.bf16.msra.mxu0 0
  %968 = vmatpush.bf16.msra.mxu0 0
  %969 = vmatpush.bf16.msra.mxu0 %v888
  %970 = vmatpush.bf16.msra.mxu0 %v578
  %971 = vmatpush.bf16.msra.mxu0 %v576
  %972 = vmatpush.bf16.msra.mxu0 %v574
  %973 = vmatpush.bf16.msra.mxu0 %v572
  %974 = vmatmul.bf16.gmra.mxu0 %v848
  %v975 = vpop.f32.mrf.mxu0
  %v976 = vadd.f32 %v903, %v975
  %v977 = vpop.f32.mrf.mxu0
  %v978 = vadd.f32 %v905, %v977
  %979 = vmatmul.bf16.gmra.mxu0 %v851
  %v980 = vpop.f32.mrf.mxu0
  %v981 = vadd.f32 %v908, %v980
  %v982 = vpop.f32.mrf.mxu0
  %v983 = vadd.f32 %v910, %v982
  %984 = vmatmul.bf16.gmra.mxu0 %v854
  %v985 = vpop.f32.mrf.mxu0
  %v986 = vadd.f32 %v913, %v985
  %v987 = vpop.f32.mrf.mxu0
  %v988 = vadd.f32 %v915, %v987
  %989 = vmatmul.bf16.gmra.mxu0 %v857
  %v990 = vpop.f32.mrf.mxu0
  %v991 = vadd.f32 %v918, %v990
  %v992 = vpop.f32.mrf.mxu0
  %v993 = vadd.f32 %v920, %v992
  %994 = vmatmul.bf16.gmra.mxu0 %v860
  %v995 = vpop.f32.mrf.mxu0
  %v996 = vadd.f32 %v923, %v995
  %v997 = vpop.f32.mrf.mxu0
  %v998 = vadd.f32 %v925, %v997
  %999 = vmatmul.bf16.gmra.mxu0 %v863
  %v1000 = vpop.f32.mrf.mxu0
  %v1001 = vadd.f32 %v928, %v1000
  %v1002 = vpop.f32.mrf.mxu0
  %v1003 = vadd.f32 %v930, %v1002
  %1004 = vmatmul.bf16.gmra.mxu0 %v866
  %v1005 = vpop.f32.mrf.mxu0
  %v1006 = vadd.f32 %v933, %v1005
  %v1007 = vpop.f32.mrf.mxu0
  %v1008 = vadd.f32 %v935, %v1007
  %1009 = vmatmul.bf16.gmra.mxu0 %v869
  %v1010 = vpop.f32.mrf.mxu0
  %v1011 = vadd.f32 %v938, %v1010
  %v1012 = vpop.f32.mrf.mxu0
  %v1013 = vadd.f32 %v940, %v1012
  %1014 = vmatmul.bf16.gmra.mxu0 %v872
  %v1015 = vpop.f32.mrf.mxu0
  %v1016 = vadd.f32 %v943, %v1015
  %v1017 = vpop.f32.mrf.mxu0
  %v1018 = vadd.f32 %v945, %v1017
  %1019 = vmatmul.bf16.gmra.mxu0 %v875
  %v1020 = vpop.f32.mrf.mxu0
  %v1021 = vadd.f32 %v948, %v1020
  %v1022 = vpop.f32.mrf.mxu0
  %v1023 = vadd.f32 %v950, %v1022
  %1024 = vmatmul.bf16.gmra.mxu0 %v878
  %v1025 = vpop.f32.mrf.mxu0
  %v1026 = vadd.f32 %v953, %v1025
  %v1027 = vpop.f32.mrf.mxu0
  %v1028 = vadd.f32 %v955, %v1027
  %1029 = vmatmul.bf16.gmra.mxu0 %v881
  %v1030 = vpop.f32.mrf.mxu0
  %v1031 = vadd.f32 %v958, %v1030
  %v1032 = vpop.f32.mrf.mxu0
  %v1033 = vadd.f32 %v960, %v1032
  %1034 = vmatmul.bf16.gmra.mxu0 %v884
  %v1035 = vpop.f32.mrf.mxu0
  %v1036 = vadd.f32 %v963, %v1035
  %v1037 = vpop.f32.mrf.mxu0
  %1038 = vdwg.mxu0
  %1039 = vmatpush.bf16.msra.mxu0 %v571
  %1040 = vmatpush.bf16.msra.mxu0 %v569
  %1041 = vmatpush.bf16.msra.mxu0 %v567
  %1042 = vmatpush.bf16.msra.mxu0 %v565
  %1043 = vmatpush.bf16.msra.mxu0 %v563
  %1044 = vmatpush.bf16.msra.mxu0 %v561
  %1045 = vmatpush.bf16.msra.mxu0 %v559
  %1046 = vmatpush.bf16.msra.mxu0 %v557
  %1047 = vmatmul.bf16.gmra.mxu0 %v807
  %v1048 = vpop.f32.mrf.mxu0
  %v1049 = vadd.f32 %v610, %v1048
  %v1050 = vpop.f32.mrf.mxu0
  %v1051 = vadd.f32 %v615, %v1050
  %1052 = vmatmul.bf16.gmra.mxu0 %v809
  %v1053 = vpop.f32.mrf.mxu0
  %v1054 = vadd.f32 %v620, %v1053
  %v1055 = vpop.f32.mrf.mxu0
  %v1056 = vadd.f32 %v625, %v1055
  %1057 = vmatmul.bf16.gmra.mxu0 %v811
  %v1058 = vpop.f32.mrf.mxu0
  %v1059 = vadd.f32 %v630, %v1058
  %v1060 = vpop.f32.mrf.mxu0
  %v1061 = vadd.f32 %v635, %v1060
  %1062 = vmatmul.bf16.gmra.mxu0 %v813
  %v1063 = vpop.f32.mrf.mxu0
  %v1064 = vadd.f32 %v640, %v1063
  %v1065 = vpop.f32.mrf.mxu0
  %v1066 = vadd.f32 %v645, %v1065
  %1067 = vmatmul.bf16.gmra.mxu0 %v815
  %v1068 = vpop.f32.mrf.mxu0
  %v1069 = vadd.f32 %v650, %v1068
  %v1070 = vpop.f32.mrf.mxu0
  %v1071 = vadd.f32 %v655, %v1070
  %1072 = vmatmul.bf16.gmra.mxu0 %v817
  %v1073 = vpop.f32.mrf.mxu0
  %v1074 = vadd.f32 %v660, %v1073
  %v1075 = vpop.f32.mrf.mxu0
  %v1076 = vadd.f32 %v665, %v1075
  %1077 = vmatmul.bf16.gmra.mxu0 %v819
  %v1078 = vpop.f32.mrf.mxu0
  %v1079 = vadd.f32 %v670, %v1078
  %v1080 = vpop.f32.mrf.mxu0
  %v1081 = vadd.f32 %v675, %v1080
  %1082 = vmatmul.bf16.gmra.mxu0 %v821
  %v1083 = vpop.f32.mrf.mxu0
  %v1084 = vadd.f32 %v680, %v1083
  %v1085 = vpop.f32.mrf.mxu0
  %v1086 = vadd.f32 %v685, %v1085
  %1087 = vmatmul.bf16.gmra.mxu0 %v823
  %v1088 = vpop.f32.mrf.mxu0
  %v1089 = vadd.f32 %v690, %v1088
  %v1090 = vpop.f32.mrf.mxu0
  %v1091 = vadd.f32 %v695, %v1090
  %1092 = vmatmul.bf16.gmra.mxu0 %v825
  %v1093 = vpop.f32.mrf.mxu0
  %v1094 = vadd.f32 %v700, %v1093
  %v1095 = vpop.f32.mrf.mxu0
  %v1096 = vadd.f32 %v705, %v1095
  %1097 = vmatmul.bf16.gmra.mxu0 %v827
  %v1098 = vpop.f32.mrf.mxu0
  %v1099 = vadd.f32 %v710, %v1098
  %v1100 = vpop.f32.mrf.mxu0
  %v1101 = vadd.f32 %v715, %v1100
  %1102 = vmatmul.bf16.gmra.mxu0 %v829
  %v1103 = vpop.f32.mrf.mxu0
  %v1104 = vadd.f32 %v720, %v1103
  %v1105 = vpop.f32.mrf.mxu0
  %v1106 = vadd.f32 %v725, %v1105
  %1107 = vmatmul.bf16.gmra.mxu0 %v831
  %v1108 = vpop.f32.mrf.mxu0
  %v1109 = vadd.f32 %v730, %v1108
  %v1110 = vpop.f32.mrf.mxu0
  %1111 = vdwg.mxu0
  %1112 = vmatpush.bf16.msra.mxu0 0
  %1113 = vmatpush.bf16.msra.mxu0 0
  %1114 = vmatpush.bf16.msra.mxu0 0
  %1115 = vmatpush.bf16.msra.mxu0 %v891
  %1116 = vmatpush.bf16.msra.mxu0 %v579
  %1117 = vmatpush.bf16.msra.mxu0 %v577
  %1118 = vmatpush.bf16.msra.mxu0 %v575
  %1119 = vmatpush.bf16.msra.mxu0 %v573
  %1120 = vmatmul.bf16.gmra.mxu0 %v848
  %v1121 = vpop.f32.mrf.mxu0
  %v1122 = vadd.f32 %v1049, %v1121
  %v1123 = vpop.f32.mrf.mxu0
  %v1124 = vadd.f32 %v1051, %v1123
  %1125 = vmatmul.bf16.gmra.mxu0 %v851
  %v1126 = vpop.f32.mrf.mxu0
  %v1127 = vadd.f32 %v1054, %v1126
  %v1128 = vpop.f32.mrf.mxu0
  %v1129 = vadd.f32 %v1056, %v1128
  %1130 = vmatmul.bf16.gmra.mxu0 %v854
  %v1131 = vpop.f32.mrf.mxu0
  %v1132 = vadd.f32 %v1059, %v1131
  %v1133 = vpop.f32.mrf.mxu0
  %v1134 = vadd.f32 %v1061, %v1133
  %1135 = vmatmul.bf16.gmra.mxu0 %v857
  %v1136 = vpop.f32.mrf.mxu0
  %v1137 = vadd.f32 %v1064, %v1136
  %v1138 = vpop.f32.mrf.mxu0
  %v1139 = vadd.f32 %v1066, %v1138
  %1140 = vmatmul.bf16.gmra.mxu0 %v860
  %v1141 = vpop.f32.mrf.mxu0
  %v1142 = vadd.f32 %v1069, %v1141
  %v1143 = vpop.f32.mrf.mxu0
  %v1144 = vadd.f32 %v1071, %v1143
  %1145 = vmatmul.bf16.gmra.mxu0 %v863
  %v1146 = vpop.f32.mrf.mxu0
  %v1147 = vadd.f32 %v1074, %v1146
  %v1148 = vpop.f32.mrf.mxu0
  %v1149 = vadd.f32 %v1076, %v1148
  %1150 = vmatmul.bf16.gmra.mxu0 %v866
  %v1151 = vpop.f32.mrf.mxu0
  %v1152 = vadd.f32 %v1079, %v1151
  %v1153 = vpop.f32.mrf.mxu0
  %v1154 = vadd.f32 %v1081, %v1153
  %1155 = vmatmul.bf16.gmra.mxu0 %v869
  %v1156 = vpop.f32.mrf.mxu0
  %v1157 = vadd.f32 %v1084, %v1156
  %v1158 = vpop.f32.mrf.mxu0
  %v1159 = vadd.f32 %v1086, %v1158
  %1160 = vmatmul.bf16.gmra.mxu0 %v872
  %v1161 = vpop.f32.mrf.mxu0
  %v1162 = vadd.f32 %v1089, %v1161
  %v1163 = vpop.f32.mrf.mxu0
  %v1164 = vadd.f32 %v1091, %v1163
  %1165 = vmatmul.bf16.gmra.mxu0 %v875
  %v1166 = vpop.f32.mrf.mxu0
  %v1167 = vadd.f32 %v1094, %v1166
  %v1168 = vpop.f32.mrf.mxu0
  %v1169 = vadd.f32 %v1096, %v1168
  %1170 = vmatmul.bf16.gmra.mxu0 %v878
  %v1171 = vpop.f32.mrf.mxu0
  %v1172 = vadd.f32 %v1099, %v1171
  %v1173 = vpop.f32.mrf.mxu0
  %v1174 = vadd.f32 %v1101, %v1173
  %1175 = vmatmul.bf16.gmra.mxu0 %v881
  %v1176 = vpop.f32.mrf.mxu0
  %v1177 = vadd.f32 %v1104, %v1176
  %v1178 = vpop.f32.mrf.mxu0
  %v1179 = vadd.f32 %v1106, %v1178
  %1180 = vmatmul.bf16.gmra.mxu0 %v884
  %v1181 = vpop.f32.mrf.mxu0
  %v1182 = vadd.f32 %v1109, %v1181
  %v1183 = vpop.f32.mrf.mxu0
  %1184 = vdwg.mxu0
  %v1185 = vmax.f32 %v976, 0.0
  %v1186 = vmax.f32 %v1122, 0.0
  %v1187 = vmax.f32 %v978, 0.0
  %v1188 = vmax.f32 %v1124, 0.0
  %v1189 = vmax.f32 %v981, 0.0
  %v1190 = vmax.f32 %v1127, 0.0
  %v1191 = vmax.f32 %v983, 0.0
  %v1192 = vmax.f32 %v1129, 0.0
  %v1193 = vmax.f32 %v986, 0.0
  %v1194 = vmax.f32 %v1132, 0.0
  %v1195 = vmax.f32 %v988, 0.0
  %v1196 = vmax.f32 %v1134, 0.0
  %v1197 = vmax.f32 %v991, 0.0
  %v1198 = vmax.f32 %v1137, 0.0
  %v1199 = vmax.f32 %v993, 0.0
  %v1200 = vmax.f32 %v1139, 0.0
  %v1201 = vmax.f32 %v996, 0.0
  %v1202 = vmax.f32 %v1142, 0.0
  %v1203 = vmax.f32 %v998, 0.0
  %v1204 = vmax.f32 %v1144, 0.0
  %v1205 = vmax.f32 %v1001, 0.0
  %v1206 = vmax.f32 %v1147, 0.0
  %v1207 = vmax.f32 %v1003, 0.0
  %v1208 = vmax.f32 %v1149, 0.0
  %v1209 = vmax.f32 %v1006, 0.0
  %v1210 = vmax.f32 %v1152, 0.0
  %v1211 = vmax.f32 %v1008, 0.0
  %v1212 = vmax.f32 %v1154, 0.0
  %v1213 = vmax.f32 %v1011, 0.0
  %v1214 = vmax.f32 %v1157, 0.0
  %v1215 = vmax.f32 %v1013, 0.0
  %v1216 = vmax.f32 %v1159, 0.0
  %v1217 = vmax.f32 %v1016, 0.0
  %v1218 = vmax.f32 %v1162, 0.0
  %v1219 = vmax.f32 %v1018, 0.0
  %v1220 = vmax.f32 %v1164, 0.0
  %v1221 = vmax.f32 %v1021, 0.0
  %v1222 = vmax.f32 %v1167, 0.0
  %v1223 = vmax.f32 %v1023, 0.0
  %v1224 = vmax.f32 %v1169, 0.0
  %v1225 = vmax.f32 %v1026, 0.0
  %v1226 = vmax.f32 %v1172, 0.0
  %v1227 = vmax.f32 %v1028, 0.0
  %v1228 = vmax.f32 %v1174, 0.0
  %v1229 = vmax.f32 %v1031, 0.0
  %v1230 = vmax.f32 %v1177, 0.0
  %v1231 = vmax.f32 %v1033, 0.0
  %v1232 = vmax.f32 %v1179, 0.0
  %v1233 = vmax.f32 %v1036, 0.0
  %v1234 = vmax.f32 %v1182, 0.0
  %v1235 = vld [vmem:[%s5] sm:$0xff]
  %v1236 = vld [vmem:[%s5 + $0x8] sm:$0xff]
  %v1237 = vld [vmem:[%s5 + $0x10] sm:$0xff]
  %v1238 = vld [vmem:[%s5 + $0x18] sm:$0xff]
  %v1239 = vld [vmem:[%s5 + $0x20] sm:$0xff]
  %v1240 = vld [vmem:[%s5 + $0x28] sm:$0xff]
  %v1241 = vld [vmem:[%s5 + $0x30] sm:$0xff]
  %v1242 = vld [vmem:[%s5 + $0x38] sm:$0xff]
  %v1243 = vld [vmem:[%s5 + $0x40] sm:$0xff]
  %v1244 = vld [vmem:[%s5 + $0x48] sm:$0xff]
  %v1245 = vld [vmem:[%s5 + $0x50] sm:$0xff]
  %v1246 = vld [vmem:[%s5 + $0x58] sm:$0xff]
  %v1247 = vld [vmem:[%s5 + $0x60] sm:$0xff]
  %v1248 = vld [vmem:[%s5 + $0x68] sm:$0xff]
  %v1249 = vld [vmem:[%s5 + $0x70] sm:$0xff]
  %v1250 = vld [vmem:[%s5 + $0x78] sm:$0xff]
  %v1251 = vld [vmem:[%s5 + $0x80] sm:$0xff]
  %v1252 = vld [vmem:[%s5 + $0x88] sm:$0xff]
  %v1253 = vld [vmem:[%s5 + $0x90] sm:$0xff]
  %v1254 = vld [vmem:[%s5 + $0x98] sm:$0xff]
  %v1255 = vld [vmem:[%s5 + $0xa0] sm:$0xff]
  %v1256 = vld [vmem:[%s5 + $0xa8] sm:$0xff]
  %v1257 = vld [vmem:[%s5 + $0xb0] sm:$0xff]
  %v1258 = vld [vmem:[%s5 + $0xb8] sm:$0xff]
  %v1259 = vld [vmem:[%s5 + $0xc0] sm:$0xff]
  %v1260 = vpack.c.bf16 %v1187, %v1185
  %v1261 = vpack.c.bf16 %v1188, %v1186
  %v1262 = vpack.c.bf16 %v1191, %v1189
  %v1263 = vpack.c.bf16 %v1192, %v1190
  %v1264 = vpack.c.bf16 %v1195, %v1193
  %v1265 = vpack.c.bf16 %v1196, %v1194
  %v1266 = vpack.c.bf16 %v1199, %v1197
  %v1267 = vpack.c.bf16 %v1200, %v1198
  %v1268 = vpack.c.bf16 %v1203, %v1201
  %v1269 = vpack.c.bf16 %v1204, %v1202
  %v1270 = vpack.c.bf16 %v1207, %v1205
  %v1271 = vpack.c.bf16 %v1208, %v1206
  %v1272 = vpack.c.bf16 %v1211, %v1209
  %v1273 = vpack.c.bf16 %v1212, %v1210
  %v1274 = vpack.c.bf16 %v1215, %v1213
  %v1275 = vpack.c.bf16 %v1216, %v1214
  %v1276 = vpack.c.bf16 %v1219, %v1217
  %v1277 = vpack.c.bf16 %v1220, %v1218
  %v1278 = vpack.c.bf16 %v1223, %v1221
  %v1279 = vpack.c.bf16 %v1224, %v1222
  %v1280 = vpack.c.bf16 %v1227, %v1225
  %v1281 = vpack.c.bf16 %v1228, %v1226
  %v1282 = vpack.c.bf16 %v1231, %v1229
  %v1283 = vpack.c.bf16 %v1232, %v1230
  %v1284 = vpack.c.bf16 %v1233, %v1233
  %v1285 = vpack.c.bf16 %v1234, %v1234
  %v1286 = vld [vmem:[%s6] sm:$0xff]
  %v1287 = vld [vmem:[%s6 + $0x8] sm:$0xff]
  %v1288 = vld [vmem:[%s6 + $0x10] sm:$0xff]
  %v1289 = vld [vmem:[%s6 + $0x18] sm:$0xff]
  %v1290 = vld [vmem:[%s6 + $0x20] sm:$0xff]
  %v1291 = vld [vmem:[%s6 + $0x28] sm:$0xff]
  %v1292 = vld [vmem:[%s6 + $0x30] sm:$0xff]
  %v1293 = vld [vmem:[%s6 + $0x38] sm:$0xff]
  %v1294 = vld [vmem:[%s6 + $0x40] sm:$0xff]
  %v1295 = vld [vmem:[%s6 + $0x48] sm:$0xff]
  %v1296 = vld [vmem:[%s6 + $0x50] sm:$0xff]
  %v1297 = vld [vmem:[%s6 + $0x58] sm:$0xff]
  %v1298 = vld [vmem:[%s6 + $0x60] sm:$0xff]
  %v1299 = vld [vmem:[%s6 + $0x68] sm:$0xff]
  %v1300 = vld [vmem:[%s6 + $0x70] sm:$0xff]
  %v1301 = vld [vmem:[%s6 + $0x78] sm:$0xff]
  %v1302 = vld [vmem:[%s6 + $0x80] sm:$0xff]
  %v1303 = vld [vmem:[%s6 + $0x88] sm:$0xff]
  %v1304 = vld [vmem:[%s6 + $0x90] sm:$0xff]
  %v1305 = vld [vmem:[%s6 + $0x98] sm:$0xff]
  %v1306 = vld [vmem:[%s6 + $0xa0] sm:$0xff]
  %v1307 = vld [vmem:[%s6 + $0xa8] sm:$0xff]
  %v1308 = vld [vmem:[%s6 + $0xb0] sm:$0xff]
  %v1309 = vld [vmem:[%s6 + $0xb8] sm:$0xff]
  %v1310 = vld [vmem:[%s6 + $0xc0] sm:$0xff]
  %1312 = vset.pattern.permute.xlu0 0
  %1313 = vperm.xlu0 %1312, %v1286
  %v1314 = vpop.permute.xlu0 %1313
  %1317 = vset.pattern.permute.xlu0 0
  %1318 = vperm.xlu0 %1317, %v1287
  %v1319 = vpop.permute.xlu0 %1318
  %1322 = vset.pattern.permute.xlu0 0
  %1323 = vperm.xlu0 %1322, %v1288
  %v1324 = vpop.permute.xlu0 %1323
  %1327 = vset.pattern.permute.xlu0 0
  %1328 = vperm.xlu0 %1327, %v1289
  %v1329 = vpop.permute.xlu0 %1328
  %1332 = vset.pattern.permute.xlu0 0
  %1333 = vperm.xlu0 %1332, %v1290
  %v1334 = vpop.permute.xlu0 %1333
  %1337 = vset.pattern.permute.xlu0 0
  %1338 = vperm.xlu0 %1337, %v1291
  %v1339 = vpop.permute.xlu0 %1338
  %1342 = vset.pattern.permute.xlu0 0
  %1343 = vperm.xlu0 %1342, %v1292
  %v1344 = vpop.permute.xlu0 %1343
  %1347 = vset.pattern.permute.xlu0 0
  %1348 = vperm.xlu0 %1347, %v1293
  %v1349 = vpop.permute.xlu0 %1348
  %1352 = vset.pattern.permute.xlu0 0
  %1353 = vperm.xlu0 %1352, %v1294
  %v1354 = vpop.permute.xlu0 %1353
  %1357 = vset.pattern.permute.xlu0 0
  %1358 = vperm.xlu0 %1357, %v1295
  %v1359 = vpop.permute.xlu0 %1358
  %1362 = vset.pattern.permute.xlu0 0
  %1363 = vperm.xlu0 %1362, %v1296
  %v1364 = vpop.permute.xlu0 %1363
  %1367 = vset.pattern.permute.xlu0 0
  %1368 = vperm.xlu0 %1367, %v1297
  %v1369 = vpop.permute.xlu0 %1368
  %1372 = vset.pattern.permute.xlu0 0
  %1373 = vperm.xlu0 %1372, %v1298
  %v1374 = vpop.permute.xlu0 %1373
  %1377 = vset.pattern.permute.xlu0 0
  %1378 = vperm.xlu0 %1377, %v1299
  %v1379 = vpop.permute.xlu0 %1378
  %1382 = vset.pattern.permute.xlu0 0
  %1383 = vperm.xlu0 %1382, %v1300
  %v1384 = vpop.permute.xlu0 %1383
  %1387 = vset.pattern.permute.xlu0 0
  %1388 = vperm.xlu0 %1387, %v1301
  %v1389 = vpop.permute.xlu0 %1388
  %1392 = vset.pattern.permute.xlu0 0
  %1393 = vperm.xlu0 %1392, %v1302
  %v1394 = vpop.permute.xlu0 %1393
  %1397 = vset.pattern.permute.xlu0 0
  %1398 = vperm.xlu0 %1397, %v1303
  %v1399 = vpop.permute.xlu0 %1398
  %1402 = vset.pattern.permute.xlu0 0
  %1403 = vperm.xlu0 %1402, %v1304
  %v1404 = vpop.permute.xlu0 %1403
  %1407 = vset.pattern.permute.xlu0 0
  %1408 = vperm.xlu0 %1407, %v1305
  %v1409 = vpop.permute.xlu0 %1408
  %1412 = vset.pattern.permute.xlu0 0
  %1413 = vperm.xlu0 %1412, %v1306
  %v1414 = vpop.permute.xlu0 %1413
  %1417 = vset.pattern.permute.xlu0 0
  %1418 = vperm.xlu0 %1417, %v1307
  %v1419 = vpop.permute.xlu0 %1418
  %1422 = vset.pattern.permute.xlu0 0
  %1423 = vperm.xlu0 %1422, %v1308
  %v1424 = vpop.permute.xlu0 %1423
  %1427 = vset.pattern.permute.xlu0 0
  %1428 = vperm.xlu0 %1427, %v1309
  %v1429 = vpop.permute.xlu0 %1428
  %1432 = vset.pattern.permute.xlu0 0
  %1433 = vperm.xlu0 %1432, %v1310
  %v1434 = vpop.permute.xlu0 %1433
  %v1461 = vunpack.c.l.b16 %v1235
  %v1462 = vunpack.c.h.b16 %v1235
  %v1463 = vunpack.c.l.b16 %v1236
  %v1464 = vunpack.c.h.b16 %v1236
  %v1465 = vunpack.c.l.b16 %v1237
  %v1466 = vunpack.c.h.b16 %v1237
  %v1467 = vunpack.c.l.b16 %v1238
  %v1468 = vunpack.c.h.b16 %v1238
  %v1469 = vunpack.c.l.b16 %v1239
  %v1470 = vunpack.c.h.b16 %v1239
  %v1471 = vunpack.c.l.b16 %v1240
  %v1472 = vunpack.c.h.b16 %v1240
  %v1473 = vunpack.c.l.b16 %v1241
  %v1474 = vunpack.c.h.b16 %v1241
  %v1475 = vunpack.c.l.b16 %v1242
  %v1476 = vunpack.c.h.b16 %v1242
  %v1477 = vunpack.c.l.b16 %v1243
  %v1478 = vunpack.c.h.b16 %v1243
  %v1479 = vunpack.c.l.b16 %v1244
  %v1480 = vunpack.c.h.b16 %v1244
  %v1481 = vunpack.c.l.b16 %v1245
  %v1482 = vunpack.c.h.b16 %v1245
  %v1483 = vunpack.c.l.b16 %v1246
  %v1484 = vunpack.c.h.b16 %v1246
  %v1485 = vunpack.c.l.b16 %v1247
  %v1486 = vunpack.c.h.b16 %v1247
  %v1487 = vunpack.c.l.b16 %v1248
  %v1488 = vunpack.c.h.b16 %v1248
  %v1489 = vunpack.c.l.b16 %v1249
  %v1490 = vunpack.c.h.b16 %v1249
  %v1491 = vunpack.c.l.b16 %v1250
  %v1492 = vunpack.c.h.b16 %v1250
  %v1493 = vunpack.c.l.b16 %v1251
  %v1494 = vunpack.c.h.b16 %v1251
  %v1495 = vunpack.c.l.b16 %v1252
  %v1496 = vunpack.c.h.b16 %v1252
  %v1497 = vunpack.c.l.b16 %v1253
  %v1498 = vunpack.c.h.b16 %v1253
  %v1499 = vunpack.c.l.b16 %v1254
  %v1500 = vunpack.c.h.b16 %v1254
  %v1501 = vunpack.c.l.b16 %v1255
  %v1502 = vunpack.c.h.b16 %v1255
  %v1503 = vunpack.c.l.b16 %v1256
  %v1504 = vunpack.c.h.b16 %v1256
  %v1505 = vunpack.c.l.b16 %v1257
  %v1506 = vunpack.c.h.b16 %v1257
  %v1507 = vunpack.c.l.b16 %v1258
  %v1508 = vunpack.c.h.b16 %v1258
  %v1509 = vunpack.c.l.b16 %v1259
  %v1510 = vunpack.c.h.b16 %v1259
  %v1511 = vpack.c.b16 %v1463, %v1461
  %v1512 = vpack.c.b16 %v1464, %v1462
  %v1513 = vpack.c.b16 %v1467, %v1465
  %v1514 = vpack.c.b16 %v1468, %v1466
  %v1515 = vpack.c.b16 %v1471, %v1469
  %v1516 = vpack.c.b16 %v1472, %v1470
  %v1517 = vpack.c.b16 %v1475, %v1473
  %v1518 = vpack.c.b16 %v1476, %v1474
  %v1519 = vpack.c.b16 %v1479, %v1477
  %v1520 = vpack.c.b16 %v1480, %v1478
  %v1521 = vpack.c.b16 %v1483, %v1481
  %v1522 = vpack.c.b16 %v1484, %v1482
  %v1523 = vpack.c.b16 %v1487, %v1485
  %v1524 = vpack.c.b16 %v1488, %v1486
  %v1525 = vpack.c.b16 %v1491, %v1489
  %v1526 = vpack.c.b16 %v1492, %v1490
  %v1527 = vpack.c.b16 %v1495, %v1493
  %v1528 = vpack.c.b16 %v1496, %v1494
  %v1529 = vpack.c.b16 %v1499, %v1497
  %v1530 = vpack.c.b16 %v1500, %v1498
  %v1531 = vpack.c.b16 %v1503, %v1501
  %v1532 = vpack.c.b16 %v1504, %v1502
  %v1533 = vpack.c.b16 %v1507, %v1505
  %v1534 = vpack.c.b16 %v1508, %v1506
  %v1535 = vpack.c.b16 %v1509, %v1509
  %v1536 = vpack.c.b16 %v1510, %v1510
  %v1551 = vsel %vm846, %v1512, 0
  %v1554 = vsel %vm846, %v1514, 0
  %v1557 = vsel %vm846, %v1516, 0
  %v1560 = vsel %vm846, %v1518, 0
  %v1563 = vsel %vm846, %v1520, 0
  %v1566 = vsel %vm846, %v1522, 0
  %v1569 = vsel %vm846, %v1524, 0
  %v1572 = vsel %vm846, %v1526, 0
  %v1575 = vsel %vm846, %v1528, 0
  %v1578 = vsel %vm846, %v1530, 0
  %v1581 = vsel %vm846, %v1532, 0
  %v1584 = vsel %vm846, %v1534, 0
  %v1587 = vsel %vm846, %v1536, 0
  %v1590 = vsel %vm886, %v1284, 0
  %v1593 = vsel %vm886, %v1285, 0
  %1595 = vmatpush.bf16.msra.mxu0 %v1274
  %1596 = vmatpush.bf16.msra.mxu0 %v1272
  %1597 = vmatpush.bf16.msra.mxu0 %v1270
  %1598 = vmatpush.bf16.msra.mxu0 %v1268
  %1599 = vmatpush.bf16.msra.mxu0 %v1266
  %1600 = vmatpush.bf16.msra.mxu0 %v1264
  %1601 = vmatpush.bf16.msra.mxu0 %v1262
  %1602 = vmatpush.bf16.msra.mxu0 %v1260
  %1603 = vmatmul.bf16.gmra.mxu0 %v1511
  %v1604 = vpop.f32.mrf.mxu0
  %v1605 = vadd.f32 %v1314, %v1604
  %v1606 = vpop.f32.mrf.mxu0
  %v1607 = vadd.f32 %v1319, %v1606
  %1608 = vmatmul.bf16.gmra.mxu0 %v1513
  %v1609 = vpop.f32.mrf.mxu0
  %v1610 = vadd.f32 %v1324, %v1609
  %v1611 = vpop.f32.mrf.mxu0
  %v1612 = vadd.f32 %v1329, %v1611
  %1613 = vmatmul.bf16.gmra.mxu0 %v1515
  %v1614 = vpop.f32.mrf.mxu0
  %v1615 = vadd.f32 %v1334, %v1614
  %v1616 = vpop.f32.mrf.mxu0
  %v1617 = vadd.f32 %v1339, %v1616
  %1618 = vmatmul.bf16.gmra.mxu0 %v1517
  %v1619 = vpop.f32.mrf.mxu0
  %v1620 = vadd.f32 %v1344, %v1619
  %v1621 = vpop.f32.mrf.mxu0
  %v1622 = vadd.f32 %v1349, %v1621
  %1623 = vmatmul.bf16.gmra.mxu0 %v1519
  %v1624 = vpop.f32.mrf.mxu0
  %v1625 = vadd.f32 %v1354, %v1624
  %v1626 = vpop.f32.mrf.mxu0
  %v1627 = vadd.f32 %v1359, %v1626
  %1628 = vmatmul.bf16.gmra.mxu0 %v1521
  %v1629 = vpop.f32.mrf.mxu0
  %v1630 = vadd.f32 %v1364, %v1629
  %v1631 = vpop.f32.mrf.mxu0
  %v1632 = vadd.f32 %v1369, %v1631
  %1633 = vmatmul.bf16.gmra.mxu0 %v1523
  %v1634 = vpop.f32.mrf.mxu0
  %v1635 = vadd.f32 %v1374, %v1634
  %v1636 = vpop.f32.mrf.mxu0
  %v1637 = vadd.f32 %v1379, %v1636
  %1638 = vmatmul.bf16.gmra.mxu0 %v1525
  %v1639 = vpop.f32.mrf.mxu0
  %v1640 = vadd.f32 %v1384, %v1639
  %v1641 = vpop.f32.mrf.mxu0
  %v1642 = vadd.f32 %v1389, %v1641
  %1643 = vmatmul.bf16.gmra.mxu0 %v1527
  %v1644 = vpop.f32.mrf.mxu0
  %v1645 = vadd.f32 %v1394, %v1644
  %v1646 = vpop.f32.mrf.mxu0
  %v1647 = vadd.f32 %v1399, %v1646
  %1648 = vmatmul.bf16.gmra.mxu0 %v1529
  %v1649 = vpop.f32.mrf.mxu0
  %v1650 = vadd.f32 %v1404, %v1649
  %v1651 = vpop.f32.mrf.mxu0
  %v1652 = vadd.f32 %v1409, %v1651
  %1653 = vmatmul.bf16.gmra.mxu0 %v1531
  %v1654 = vpop.f32.mrf.mxu0
  %v1655 = vadd.f32 %v1414, %v1654
  %v1656 = vpop.f32.mrf.mxu0
  %v1657 = vadd.f32 %v1419, %v1656
  %1658 = vmatmul.bf16.gmra.mxu0 %v1533
  %v1659 = vpop.f32.mrf.mxu0
  %v1660 = vadd.f32 %v1424, %v1659
  %v1661 = vpop.f32.mrf.mxu0
  %v1662 = vadd.f32 %v1429, %v1661
  %1663 = vmatmul.bf16.gmra.mxu0 %v1535
  %v1664 = vpop.f32.mrf.mxu0
  %v1665 = vadd.f32 %v1434, %v1664
  %v1666 = vpop.f32.mrf.mxu0
  %1667 = vdwg.mxu0
  %1668 = vmatpush.bf16.msra.mxu0 0
  %1669 = vmatpush.bf16.msra.mxu0 0
  %1670 = vmatpush.bf16.msra.mxu0 0
  %1671 = vmatpush.bf16.msra.mxu0 %v1590
  %1672 = vmatpush.bf16.msra.mxu0 %v1282
  %1673 = vmatpush.bf16.msra.mxu0 %v1280
  %1674 = vmatpush.bf16.msra.mxu0 %v1278
  %1675 = vmatpush.bf16.msra.mxu0 %v1276
  %1676 = vmatmul.bf16.gmra.mxu0 %v1551
  %v1677 = vpop.f32.mrf.mxu0
  %v1678 = vadd.f32 %v1605, %v1677
  %v1679 = vpop.f32.mrf.mxu0
  %v1680 = vadd.f32 %v1607, %v1679
  %1681 = vmatmul.bf16.gmra.mxu0 %v1554
  %v1682 = vpop.f32.mrf.mxu0
  %v1683 = vadd.f32 %v1610, %v1682
  %v1684 = vpop.f32.mrf.mxu0
  %v1685 = vadd.f32 %v1612, %v1684
  %1686 = vmatmul.bf16.gmra.mxu0 %v1557
  %v1687 = vpop.f32.mrf.mxu0
  %v1688 = vadd.f32 %v1615, %v1687
  %v1689 = vpop.f32.mrf.mxu0
  %v1690 = vadd.f32 %v1617, %v1689
  %1691 = vmatmul.bf16.gmra.mxu0 %v1560
  %v1692 = vpop.f32.mrf.mxu0
  %v1693 = vadd.f32 %v1620, %v1692
  %v1694 = vpop.f32.mrf.mxu0
  %v1695 = vadd.f32 %v1622, %v1694
  %1696 = vmatmul.bf16.gmra.mxu0 %v1563
  %v1697 = vpop.f32.mrf.mxu0
  %v1698 = vadd.f32 %v1625, %v1697
  %v1699 = vpop.f32.mrf.mxu0
  %v1700 = vadd.f32 %v1627, %v1699
  %1701 = vmatmul.bf16.gmra.mxu0 %v1566
  %v1702 = vpop.f32.mrf.mxu0
  %v1703 = vadd.f32 %v1630, %v1702
  %v1704 = vpop.f32.mrf.mxu0
  %v1705 = vadd.f32 %v1632, %v1704
  %1706 = vmatmul.bf16.gmra.mxu0 %v1569
  %v1707 = vpop.f32.mrf.mxu0
  %v1708 = vadd.f32 %v1635, %v1707
  %v1709 = vpop.f32.mrf.mxu0
  %v1710 = vadd.f32 %v1637, %v1709
  %1711 = vmatmul.bf16.gmra.mxu0 %v1572
  %v1712 = vpop.f32.mrf.mxu0
  %v1713 = vadd.f32 %v1640, %v1712
  %v1714 = vpop.f32.mrf.mxu0
  %v1715 = vadd.f32 %v1642, %v1714
  %1716 = vmatmul.bf16.gmra.mxu0 %v1575
  %v1717 = vpop.f32.mrf.mxu0
  %v1718 = vadd.f32 %v1645, %v1717
  %v1719 = vpop.f32.mrf.mxu0
  %v1720 = vadd.f32 %v1647, %v1719
  %1721 = vmatmul.bf16.gmra.mxu0 %v1578
  %v1722 = vpop.f32.mrf.mxu0
  %v1723 = vadd.f32 %v1650, %v1722
  %v1724 = vpop.f32.mrf.mxu0
  %v1725 = vadd.f32 %v1652, %v1724
  %1726 = vmatmul.bf16.gmra.mxu0 %v1581
  %v1727 = vpop.f32.mrf.mxu0
  %v1728 = vadd.f32 %v1655, %v1727
  %v1729 = vpop.f32.mrf.mxu0
  %v1730 = vadd.f32 %v1657, %v1729
  %1731 = vmatmul.bf16.gmra.mxu0 %v1584
  %v1732 = vpop.f32.mrf.mxu0
  %v1733 = vadd.f32 %v1660, %v1732
  %v1734 = vpop.f32.mrf.mxu0
  %v1735 = vadd.f32 %v1662, %v1734
  %1736 = vmatmul.bf16.gmra.mxu0 %v1587
  %v1737 = vpop.f32.mrf.mxu0
  %v1738 = vadd.f32 %v1665, %v1737
  %v1739 = vpop.f32.mrf.mxu0
  %1740 = vdwg.mxu0
  %1741 = vmatpush.bf16.msra.mxu0 %v1275
  %1742 = vmatpush.bf16.msra.mxu0 %v1273
  %1743 = vmatpush.bf16.msra.mxu0 %v1271
  %1744 = vmatpush.bf16.msra.mxu0 %v1269
  %1745 = vmatpush.bf16.msra.mxu0 %v1267
  %1746 = vmatpush.bf16.msra.mxu0 %v1265
  %1747 = vmatpush.bf16.msra.mxu0 %v1263
  %1748 = vmatpush.bf16.msra.mxu0 %v1261
  %1749 = vmatmul.bf16.gmra.mxu0 %v1511
  %v1750 = vpop.f32.mrf.mxu0
  %v1751 = vadd.f32 %v1314, %v1750
  %v1752 = vpop.f32.mrf.mxu0
  %v1753 = vadd.f32 %v1319, %v1752
  %1754 = vmatmul.bf16.gmra.mxu0 %v1513
  %v1755 = vpop.f32.mrf.mxu0
  %v1756 = vadd.f32 %v1324, %v1755
  %v1757 = vpop.f32.mrf.mxu0
  %v1758 = vadd.f32 %v1329, %v1757
  %1759 = vmatmul.bf16.gmra.mxu0 %v1515
  %v1760 = vpop.f32.mrf.mxu0
  %v1761 = vadd.f32 %v1334, %v1760
  %v1762 = vpop.f32.mrf.mxu0
  %v1763 = vadd.f32 %v1339, %v1762
  %1764 = vmatmul.bf16.gmra.mxu0 %v1517
  %v1765 = vpop.f32.mrf.mxu0
  %v1766 = vadd.f32 %v1344, %v1765
  %v1767 = vpop.f32.mrf.mxu0
  %v1768 = vadd.f32 %v1349, %v1767
  %1769 = vmatmul.bf16.gmra.mxu0 %v1519
  %v1770 = vpop.f32.mrf.mxu0
  %v1771 = vadd.f32 %v1354, %v1770
  %v1772 = vpop.f32.mrf.mxu0
  %v1773 = vadd.f32 %v1359, %v1772
  %1774 = vmatmul.bf16.gmra.mxu0 %v1521
  %v1775 = vpop.f32.mrf.mxu0
  %v1776 = vadd.f32 %v1364, %v1775
  %v1777 = vpop.f32.mrf.mxu0
  %v1778 = vadd.f32 %v1369, %v1777
  %1779 = vmatmul.bf16.gmra.mxu0 %v1523
  %v1780 = vpop.f32.mrf.mxu0
  %v1781 = vadd.f32 %v1374, %v1780
  %v1782 = vpop.f32.mrf.mxu0
  %v1783 = vadd.f32 %v1379, %v1782
  %1784 = vmatmul.bf16.gmra.mxu0 %v1525
  %v1785 = vpop.f32.mrf.mxu0
  %v1786 = vadd.f32 %v1384, %v1785
  %v1787 = vpop.f32.mrf.mxu0
  %v1788 = vadd.f32 %v1389, %v1787
  %1789 = vmatmul.bf16.gmra.mxu0 %v1527
  %v1790 = vpop.f32.mrf.mxu0
  %v1791 = vadd.f32 %v1394, %v1790
  %v1792 = vpop.f32.mrf.mxu0
  %v1793 = vadd.f32 %v1399, %v1792
  %1794 = vmatmul.bf16.gmra.mxu0 %v1529
  %v1795 = vpop.f32.mrf.mxu0
  %v1796 = vadd.f32 %v1404, %v1795
  %v1797 = vpop.f32.mrf.mxu0
  %v1798 = vadd.f32 %v1409, %v1797
  %1799 = vmatmul.bf16.gmra.mxu0 %v1531
  %v1800 = vpop.f32.mrf.mxu0
  %v1801 = vadd.f32 %v1414, %v1800
  %v1802 = vpop.f32.mrf.mxu0
  %v1803 = vadd.f32 %v1419, %v1802
  %1804 = vmatmul.bf16.gmra.mxu0 %v1533
  %v1805 = vpop.f32.mrf.mxu0
  %v1806 = vadd.f32 %v1424, %v1805
  %v1807 = vpop.f32.mrf.mxu0
  %v1808 = vadd.f32 %v1429, %v1807
  %1809 = vmatmul.bf16.gmra.mxu0 %v1535
  %v1810 = vpop.f32.mrf.mxu0
  %v1811 = vadd.f32 %v1434, %v1810
  %v1812 = vpop.f32.mrf.mxu0
  %1813 = vdwg.mxu0
  %1814 = vmatpush.bf16.msra.mxu0 0
  %1815 = vmatpush.bf16.msra.mxu0 0
  %1816 = vmatpush.bf16.msra.mxu0 0
  %1817 = vmatpush.bf16.msra.mxu0 %v1593
  %1818 = vmatpush.bf16.msra.mxu0 %v1283
  %1819 = vmatpush.bf16.msra.mxu0 %v1281
  %1820 = vmatpush.bf16.msra.mxu0 %v1279
  %1821 = vmatpush.bf16.msra.mxu0 %v1277
  %1822 = vmatmul.bf16.gmra.mxu0 %v1551
  %v1823 = vpop.f32.mrf.mxu0
  %v1824 = vadd.f32 %v1751, %v1823
  %v1825 = vpop.f32.mrf.mxu0
  %v1826 = vadd.f32 %v1753, %v1825
  %1827 = vmatmul.bf16.gmra.mxu0 %v1554
  %v1828 = vpop.f32.mrf.mxu0
  %v1829 = vadd.f32 %v1756, %v1828
  %v1830 = vpop.f32.mrf.mxu0
  %v1831 = vadd.f32 %v1758, %v1830
  %1832 = vmatmul.bf16.gmra.mxu0 %v1557
  %v1833 = vpop.f32.mrf.mxu0
  %v1834 = vadd.f32 %v1761, %v1833
  %v1835 = vpop.f32.mrf.mxu0
  %v1836 = vadd.f32 %v1763, %v1835
  %1837 = vmatmul.bf16.gmra.mxu0 %v1560
  %v1838 = vpop.f32.mrf.mxu0
  %v1839 = vadd.f32 %v1766, %v1838
  %v1840 = vpop.f32.mrf.mxu0
  %v1841 = vadd.f32 %v1768, %v1840
  %1842 = vmatmul.bf16.gmra.mxu0 %v1563
  %v1843 = vpop.f32.mrf.mxu0
  %v1844 = vadd.f32 %v1771, %v1843
  %v1845 = vpop.f32.mrf.mxu0
  %v1846 = vadd.f32 %v1773, %v1845
  %1847 = vmatmul.bf16.gmra.mxu0 %v1566
  %v1848 = vpop.f32.mrf.mxu0
  %v1849 = vadd.f32 %v1776, %v1848
  %v1850 = vpop.f32.mrf.mxu0
  %v1851 = vadd.f32 %v1778, %v1850
  %1852 = vmatmul.bf16.gmra.mxu0 %v1569
  %v1853 = vpop.f32.mrf.mxu0
  %v1854 = vadd.f32 %v1781, %v1853
  %v1855 = vpop.f32.mrf.mxu0
  %v1856 = vadd.f32 %v1783, %v1855
  %1857 = vmatmul.bf16.gmra.mxu0 %v1572
  %v1858 = vpop.f32.mrf.mxu0
  %v1859 = vadd.f32 %v1786, %v1858
  %v1860 = vpop.f32.mrf.mxu0
  %v1861 = vadd.f32 %v1788, %v1860
  %1862 = vmatmul.bf16.gmra.mxu0 %v1575
  %v1863 = vpop.f32.mrf.mxu0
  %v1864 = vadd.f32 %v1791, %v1863
  %v1865 = vpop.f32.mrf.mxu0
  %v1866 = vadd.f32 %v1793, %v1865
  %1867 = vmatmul.bf16.gmra.mxu0 %v1578
  %v1868 = vpop.f32.mrf.mxu0
  %v1869 = vadd.f32 %v1796, %v1868
  %v1870 = vpop.f32.mrf.mxu0
  %v1871 = vadd.f32 %v1798, %v1870
  %1872 = vmatmul.bf16.gmra.mxu0 %v1581
  %v1873 = vpop.f32.mrf.mxu0
  %v1874 = vadd.f32 %v1801, %v1873
  %v1875 = vpop.f32.mrf.mxu0
  %v1876 = vadd.f32 %v1803, %v1875
  %1877 = vmatmul.bf16.gmra.mxu0 %v1584
  %v1878 = vpop.f32.mrf.mxu0
  %v1879 = vadd.f32 %v1806, %v1878
  %v1880 = vpop.f32.mrf.mxu0
  %v1881 = vadd.f32 %v1808, %v1880
  %1882 = vmatmul.bf16.gmra.mxu0 %v1587
  %v1883 = vpop.f32.mrf.mxu0
  %v1884 = vadd.f32 %v1811, %v1883
  %v1885 = vpop.f32.mrf.mxu0
  %1886 = vdwg.mxu0
  %v1887 = vmax.f32 %v1678, 0.0
  %v1888 = vmax.f32 %v1824, 0.0
  %v1889 = vmax.f32 %v1680, 0.0
  %v1890 = vmax.f32 %v1826, 0.0
  %v1891 = vmax.f32 %v1683, 0.0
  %v1892 = vmax.f32 %v1829, 0.0
  %v1893 = vmax.f32 %v1685, 0.0
  %v1894 = vmax.f32 %v1831, 0.0
  %v1895 = vmax.f32 %v1688, 0.0
  %v1896 = vmax.f32 %v1834, 0.0
  %v1897 = vmax.f32 %v1690, 0.0
  %v1898 = vmax.f32 %v1836, 0.0
  %v1899 = vmax.f32 %v1693, 0.0
  %v1900 = vmax.f32 %v1839, 0.0
  %v1901 = vmax.f32 %v1695, 0.0
  %v1902 = vmax.f32 %v1841, 0.0
  %v1903 = vmax.f32 %v1698, 0.0
  %v1904 = vmax.f32 %v1844, 0.0
  %v1905 = vmax.f32 %v1700, 0.0
  %v1906 = vmax.f32 %v1846, 0.0
  %v1907 = vmax.f32 %v1703, 0.0
  %v1908 = vmax.f32 %v1849, 0.0
  %v1909 = vmax.f32 %v1705, 0.0
  %v1910 = vmax.f32 %v1851, 0.0
  %v1911 = vmax.f32 %v1708, 0.0
  %v1912 = vmax.f32 %v1854, 0.0
  %v1913 = vmax.f32 %v1710, 0.0
  %v1914 = vmax.f32 %v1856, 0.0
  %v1915 = vmax.f32 %v1713, 0.0
  %v1916 = vmax.f32 %v1859, 0.0
  %v1917 = vmax.f32 %v1715, 0.0
  %v1918 = vmax.f32 %v1861, 0.0
  %v1919 = vmax.f32 %v1718, 0.0
  %v1920 = vmax.f32 %v1864, 0.0
  %v1921 = vmax.f32 %v1720, 0.0
  %v1922 = vmax.f32 %v1866, 0.0
  %v1923 = vmax.f32 %v1723, 0.0
  %v1924 = vmax.f32 %v1869, 0.0
  %v1925 = vmax.f32 %v1725, 0.0
  %v1926 = vmax.f32 %v1871, 0.0
  %v1927 = vmax.f32 %v1728, 0.0
  %v1928 = vmax.f32 %v1874, 0.0
  %v1929 = vmax.f32 %v1730, 0.0
  %v1930 = vmax.f32 %v1876, 0.0
  %v1931 = vmax.f32 %v1733, 0.0
  %v1932 = vmax.f32 %v1879, 0.0
  %v1933 = vmax.f32 %v1735, 0.0
  %v1934 = vmax.f32 %v1881, 0.0
  %v1935 = vmax.f32 %v1738, 0.0
  %v1936 = vmax.f32 %v1884, 0.0
  %v1937 = vld [vmem:[%s7] sm:$0x3]
  %v1938 = vpack.c.bf16 %v1889, %v1887
  %v1939 = vpack.c.bf16 %v1890, %v1888
  %v1940 = vpack.c.bf16 %v1893, %v1891
  %v1941 = vpack.c.bf16 %v1894, %v1892
  %v1942 = vpack.c.bf16 %v1897, %v1895
  %v1943 = vpack.c.bf16 %v1898, %v1896
  %v1944 = vpack.c.bf16 %v1901, %v1899
  %v1945 = vpack.c.bf16 %v1902, %v1900
  %v1946 = vpack.c.bf16 %v1905, %v1903
  %v1947 = vpack.c.bf16 %v1906, %v1904
  %v1948 = vpack.c.bf16 %v1909, %v1907
  %v1949 = vpack.c.bf16 %v1910, %v1908
  %v1950 = vpack.c.bf16 %v1913, %v1911
  %v1951 = vpack.c.bf16 %v1914, %v1912
  %v1952 = vpack.c.bf16 %v1917, %v1915
  %v1953 = vpack.c.bf16 %v1918, %v1916
  %v1954 = vpack.c.bf16 %v1921, %v1919
  %v1955 = vpack.c.bf16 %v1922, %v1920
  %v1956 = vpack.c.bf16 %v1925, %v1923
  %v1957 = vpack.c.bf16 %v1926, %v1924
  %v1958 = vpack.c.bf16 %v1929, %v1927
  %v1959 = vpack.c.bf16 %v1930, %v1928
  %v1960 = vpack.c.bf16 %v1933, %v1931
  %v1961 = vpack.c.bf16 %v1934, %v1932
  %v1962 = vpack.c.bf16 %v1935, %v1935
  %v1963 = vpack.c.bf16 %v1936, %v1936
  %v1964 = vld [vmem:[%s8] sm:$0x3]
  %1966 = vset.pattern.permute.xlu0 0
  %1967 = vperm.xlu0 %1966, %v1964
  %v1968 = vpop.permute.xlu0 %1967
  %1971 = vst [vmem:[#allocation1] ss:$9 sm:$0xff] %v1937
  %v1972 = vld [vmem:[#allocation1] sm:$0xff]
  %v1973 = vld [vmem:[#allocation1 + $0x9] sm:$0xff]
  %v1975 = vsel %vm846, %v1973, 0
  %v1978 = vsel %vm886, %v1962, 0
  %v1981 = vsel %vm886, %v1963, 0
  %1983 = vmatpush.bf16.msra.mxu0 %v1952
  %1984 = vmatpush.bf16.msra.mxu0 %v1950
  %1985 = vmatpush.bf16.msra.mxu0 %v1948
  %1986 = vmatpush.bf16.msra.mxu0 %v1946
  %1987 = vmatpush.bf16.msra.mxu0 %v1944
  %1988 = vmatpush.bf16.msra.mxu0 %v1942
  %1989 = vmatpush.bf16.msra.mxu0 %v1940
  %1990 = vmatpush.bf16.msra.mxu0 %v1938
  %1991 = vmatmul.bf16.gmra.mxu0 %v1972
  %v1992 = vpop.f32.mrf.mxu0
  %v1993 = vadd.f32 %v1968, %v1992
  %v1994 = vpop.f32.mrf.mxu0
  %1995 = vdwg.mxu0
  %1996 = vmatpush.bf16.msra.mxu0 0
  %1997 = vmatpush.bf16.msra.mxu0 0
  %1998 = vmatpush.bf16.msra.mxu0 0
  %1999 = vmatpush.bf16.msra.mxu0 %v1978
  %2000 = vmatpush.bf16.msra.mxu0 %v1960
  %2001 = vmatpush.bf16.msra.mxu0 %v1958
  %2002 = vmatpush.bf16.msra.mxu0 %v1956
  %2003 = vmatpush.bf16.msra.mxu0 %v1954
  %2004 = vmatmul.bf16.gmra.mxu0 %v1975
  %v2005 = vpop.f32.mrf.mxu0
  %v2006 = vadd.f32 %v1993, %v2005
  %v2007 = vpop.f32.mrf.mxu0
  %2008 = vdwg.mxu0
  %2009 = vmatpush.bf16.msra.mxu0 %v1953
  %2010 = vmatpush.bf16.msra.mxu0 %v1951
  %2011 = vmatpush.bf16.msra.mxu0 %v1949
  %2012 = vmatpush.bf16.msra.mxu0 %v1947
  %2013 = vmatpush.bf16.msra.mxu0 %v1945
  %2014 = vmatpush.bf16.msra.mxu0 %v1943
  %2015 = vmatpush.bf16.msra.mxu0 %v1941
  %2016 = vmatpush.bf16.msra.mxu0 %v1939
  %2017 = vmatmul.bf16.gmra.mxu0 %v1972
  %v2018 = vpop.f32.mrf.mxu0
  %v2019 = vadd.f32 %v1968, %v2018
  %v2020 = vpop.f32.mrf.mxu0
  %2021 = vdwg.mxu0
  %2022 = vmatpush.bf16.msra.mxu0 0
  %2023 = vmatpush.bf16.msra.mxu0 0
  %2024 = vmatpush.bf16.msra.mxu0 0
  %2025 = vmatpush.bf16.msra.mxu0 %v1981
  %2026 = vmatpush.bf16.msra.mxu0 %v1961
  %2027 = vmatpush.bf16.msra.mxu0 %v1959
  %2028 = vmatpush.bf16.msra.mxu0 %v1957
  %2029 = vmatpush.bf16.msra.mxu0 %v1955
  %2030 = vmatmul.bf16.gmra.mxu0 %v1975
  %v2031 = vpop.f32.mrf.mxu0
  %v2032 = vadd.f32 %v2019, %v2031
  %v2033 = vpop.f32.mrf.mxu0
  %2034 = vdwg.mxu0
  %v2035 = vtanh.pop %v2006
  %v2036 = vtanh.pop %v2032
  %v2039 = vrot.slane %v2036, 6
  %vm2040 = vcmask 1041408
  %v2041 = vsel %vm2040, %v2035, %v2039
  %2043 = vst [vmem:[%s9] sm:$0xf] %v2041
  // Predicated region
  $region38: #{actor_forward.1} parent=0 // pred_check
    _
  $region39: #{actor_forward.1} parent=0 // pred_check_branch
    %2045 = sbr.rel (0) target = $region41
  $region40: #{actor_forward.1} parent=0 // pred_region
    _
  $region41: #{actor_forward.1} parent=0 // pred_fallthru
    _
  // Predicated region
  $region42: #{actor_forward.1} parent=0 // pred_check
    _
  $region43: #{actor_forward.1} parent=0 // pred_check_branch
    %2047 = sbr.rel (0) target = $region45
  $region44: #{actor_forward.1} parent=0 // pred_region
    _
  $region45: #{actor_forward.1} parent=0 // pred_fallthru
    _

</llo_original>
